<compile_context>
chip_gen: v5e
topology: v5e:2x2
jax: 0.10.0
libtpu: 0.0.40
codegen_flags: <defaults>
</compile_context>

<pallas_src>
import functools

import jax
import jax.numpy as jnp
from jax.experimental import pallas as pl
from jax.experimental.pallas import tpu as pltpu

IN_FEATURES = 1024
OUT_FEATURES = 10
PAD_N = 128                  # lane-dense padded output width (multiple of 128)
DEFAULT_TM = 1024            # batch tile (rows of x per grid step)
SMALL_BATCH_THRESHOLD = 512  # below ~one tile, the plain XLA dot wins


def linear_kernel(x_ref, w_ref, b_ref, o_ref):
    # x_ref: (TM, 1024), w_ref: (1024, 128), b_ref: (1, 128), o_ref: (TM, 128)
    acc = jnp.dot(x_ref[...], w_ref[...], preferred_element_type=jnp.float32)
    o_ref[...] = (acc + b_ref[...]).astype(o_ref.dtype)


@functools.partial(jax.jit, static_argnames=("tm",))
def _linear_pallas_padded(x, w_pad, b_pad, *, tm):
    B = x.shape[0]
    grid_b = pl.cdiv(B, tm)  # ragged last block handled by Pallas masking

    out = pl.pallas_call(
        linear_kernel,
        out_shape=jax.ShapeDtypeStruct((B, PAD_N), jnp.float32),
        grid_spec=pltpu.PrefetchScalarGridSpec(
            num_scalar_prefetch=0,
            grid=(grid_b,),
            in_specs=[
                # x tile marches over the batch; W and bias stay resident
                # (constant index_map -> the DMA is skipped after step 0).
                pl.BlockSpec((tm, IN_FEATURES), lambda i: (i, 0)),
                pl.BlockSpec((IN_FEATURES, PAD_N), lambda i: (0, 0)),
                pl.BlockSpec((1, PAD_N), lambda i: (0, 0)),
            ],
            out_specs=pl.BlockSpec((tm, PAD_N), lambda i: (i, 0)),
        ),
        compiler_params=pltpu.CompilerParams(
            dimension_semantics=("parallel",),  # megacore sharding on v7x
        ),
    )(x, w_pad, b_pad)
    # Lane-dense (B, 128) -> logical (B, 10).  Rows are exact (no row pad).
    return out[:, :OUT_FEATURES]


def _choose_tm(B, tm):
    """Batch tile: multiple of 8 sublanes and at least 2 grid steps (v7x)."""
    tm = min(tm, B)
    if tm >= B:
        # Split into two blocks so the parallel axis has work for both v7x
        # TensorCores; round up to an 8-sublane multiple.
        tm = max(8, (((B + 1) // 2) + 7) // 8 * 8)
    return tm


class PallasLinear:
    """Pallas port of torch.nn.Linear(1024, 10).

    `weight` uses torch's stored layout (out_features, in_features) = (10, 1024)
    and `bias` is (10,).  Transpose + zero-padding of the output-feature dim to
    a lane-dense 128 happens once here (weights are static), not per call.
    """

    def __init__(self, weight, bias):
        assert weight.shape == (OUT_FEATURES, IN_FEATURES)
        assert bias.shape == (OUT_FEATURES,)
        wt = jnp.asarray(weight, jnp.float32).T              # (1024, 10)
        self.wt = wt                                          # small-batch path
        self.b = jnp.asarray(bias, jnp.float32)
        self.w_pad = (
            jnp.zeros((IN_FEATURES, PAD_N), jnp.float32)
            .at[:, :OUT_FEATURES].set(wt)
        )
        self.b_pad = (
            jnp.zeros((1, PAD_N), jnp.float32)
            .at[0, :OUT_FEATURES].set(self.b)
        )

    def __call__(self, x, *, tm=DEFAULT_TM):
        x = jnp.asarray(x, jnp.float32)
        B = x.shape[0]
        if B < SMALL_BATCH_THRESHOLD:
            # Tiny batch (e.g. the spec's B=1): fixed pallas_call overhead
            # dwarfs ~20 KFLOP of work; the fused XLA dot is strictly faster.
            return x @ self.wt + self.b
        return _linear_pallas_padded(
            x, self.w_pad, self.b_pad, tm=_choose_tm(B, tm)
        )


if __name__ == "__main__":
    key = jax.random.PRNGKey(0)
    kw, kb, kx0, kx1, kx2 = jax.random.split(key, 5)

    # torch.nn.Linear default init: U(-1/sqrt(fan_in), +1/sqrt(fan_in)),
    # weight stored (out_features, in_features).
    bound = 1.0 / (IN_FEATURES ** 0.5)
    weight = jax.random.uniform(
        kw, (OUT_FEATURES, IN_FEATURES), jnp.float32, minval=-bound, maxval=bound
    )
    bias = jax.random.uniform(
        kb, (OUT_FEATURES,), jnp.float32, minval=-bound, maxval=bound
    )
    model = PallasLinear(weight, bias)

    def ref(x):
        return x @ weight.T + bias

    # The spec's literal input shape (1, 1024): small-batch XLA fast path.
    x1 = jax.random.uniform(kx0, (1, IN_FEATURES), jnp.float32)
    out1 = jax.block_until_ready(model(x1))
    assert out1.shape == (1, OUT_FEATURES)
    assert jnp.allclose(out1, ref(x1), atol=1e-4, rtol=1e-5)

    # Pallas path, divisible batch: tm halves to 512 -> grid=(2,) so both v7x
    # TensorCores get a tile.
    xb = jax.random.uniform(kx1, (1024, IN_FEATURES), jnp.float32)
    outb = jax.block_until_ready(model(xb))
    assert outb.shape == (1024, OUT_FEATURES)
    assert jnp.allclose(outb, ref(xb), atol=1e-4, rtol=1e-5)

    # Pallas path, ragged last block (1300 % 1024 != 0), no jnp.pad of x.
    xr = jax.random.uniform(kx2, (1300, IN_FEATURES), jnp.float32)
    outr = jax.block_until_ready(model(xr))
    assert outr.shape == (1300, OUT_FEATURES)
    assert jnp.allclose(outr, ref(xr), atol=1e-4, rtol=1e-5)

    print("KERNEL_OK")
</pallas_src>

<mosaic_0001>
module attributes {stable_mosaic.version = 11 : i64} {
  func.func @linear_kernel(%arg0: i32, %arg1: memref<512x1024xf32, #tpu.memory_space<vmem>>, %arg2: memref<1024x128xf32, #tpu.memory_space<vmem>>, %arg3: memref<1x128xf32, #tpu.memory_space<vmem>>, %arg4: memref<512x128xf32, #tpu.memory_space<vmem>>) attributes {dimension_semantics = [#tpu.dimension_semantics<parallel>], iteration_bounds = array<i64: 2>, scalar_prefetch = 0 : i64, scratch_operands = 0 : i64, tpu.core_type = #tpu.core_type<tc>, window_params = [{transform_indices = @transform_0, window_bounds = array<i64: 512, 1024>}, {pipeline_mode = #tpu.pipeline_mode<synchronous>, transform_indices = @transform_1, window_bounds = array<i64: 1024, 128>}, {pipeline_mode = #tpu.pipeline_mode<synchronous>, transform_indices = @transform_2, window_bounds = array<i64: 1, 128>}, {transform_indices = @transform_3, window_bounds = array<i64: 512, 128>}]} {
    %c0 = arith.constant 0 : index
    %c0_0 = arith.constant 0 : index
    %0 = vector.load %arg1[%c0, %c0_0] : memref<512x1024xf32, #tpu.memory_space<vmem>>, vector<512x1024xf32>
    %c0_1 = arith.constant 0 : index
    %c0_2 = arith.constant 0 : index
    %1 = vector.load %arg2[%c0_1, %c0_2] : memref<1024x128xf32, #tpu.memory_space<vmem>>, vector<1024x128xf32>
    %cst = arith.constant dense<0.000000e+00> : vector<512x128xf32>
    %2 = tpu.matmul %0, %1, %cst {dimension_numbers = #tpu.dot_dimension_numbers<[1], [0], [0], [1], [0, 0, 1, 1], [], []>} : vector<512x1024xf32>, vector<1024x128xf32>, vector<512x128xf32> -> vector<512x128xf32>
    %c0_3 = arith.constant 0 : index
    %c0_4 = arith.constant 0 : index
    %3 = vector.load %arg3[%c0_3, %c0_4] : memref<1x128xf32, #tpu.memory_space<vmem>>, vector<1x128xf32>
    %4 = vector.broadcast %3 : vector<1x128xf32> to vector<512x128xf32>
    %5 = arith.addf %2, %4 : vector<512x128xf32>
    %c0_5 = arith.constant 0 : index
    %c0_6 = arith.constant 0 : index
    %6 = vector.load %arg4[%c0_5, %c0_6] : memref<512x128xf32, #tpu.memory_space<vmem>>, vector<512x128xf32>
    tpu.vector_store %arg4[%c0_5, %c0_6], %5 {strides = array<i32>} : memref<512x128xf32, #tpu.memory_space<vmem>>, vector<512x128xf32>,
    return
  }
  func.func @transform_0(%arg0: i32) -> (i32, i32) {
    %c0_i32 = arith.constant 0 : i32
    %c0_i32_0 = arith.constant 0 : i32
    return %arg0, %c0_i32 : i32, i32
  }
  func.func @transform_1(%arg0: i32) -> (i32, i32) {
    %c0_i32 = arith.constant 0 : i32
    %c0_i32_0 = arith.constant 0 : i32
    %c0_i32_1 = arith.constant 0 : i32
    return %c0_i32, %c0_i32_0 : i32, i32
  }
  func.func @transform_2(%arg0: i32) -> (i32, i32) {
    %c0_i32 = arith.constant 0 : i32
    %c0_i32_0 = arith.constant 0 : i32
    %c0_i32_1 = arith.constant 0 : i32
    return %c0_i32, %c0_i32_0 : i32, i32
  }
  func.func @transform_3(%arg0: i32) -> (i32, i32) {
    %c0_i32 = arith.constant 0 : i32
    %c0_i32_0 = arith.constant 0 : i32
    return %arg0, %c0_i32 : i32, i32
  }
}

</mosaic_0001>

<llo_original>
// kernel: _linear_pallas_padded.1
$region0: #{_linear_pallas_padded.1}
  #allocation0 [shape = 'u32[]', space=smem, size = 0x4, offset = 0x4, fixed_abs, tag = 'smem constant byte address 0x4 - core index']
  #allocation1 [shape = 'u32[72,128]{1,0:T(1,128)}', space=vmem, size = 0x9000, scoped, tag = 'internal scratch']
  %s0 = inlined_call_operand.hbm [shape: f32[1024,1024], index: 0, kind: input, shape index: {}]
  %s1 = inlined_call_operand.hbm [shape: f32[1024,128], index: 1, kind: input, shape index: {}]
  %s2 = inlined_call_operand.hbm [shape: f32[1,128], index: 2, kind: input, shape index: {}]
  %s3 = inlined_call_operand.vmem [shape: f32[1024,128], index: 3, kind: output, shape index: {}]
  %s4 = sld [smem:[#allocation0]]
  $region57: #{_linear_pallas_padded.1} parent=0
    _
  %s6 = ssub.s32 1, %s4
  %s7 = scalar_select 0, %s6, %s4
  $region1: #{_linear_pallas_padded.1} parent=0
    #allocation2 [shape = 'u8[4194304]{0}', space=vmem, size = 0x400000, scoped, tag = 'input window, operand 0']
    #allocation3 [shape = 's32[2]{0}', space=sflag, size = 0x8, scoped, tag = 'scoped memory for _linear_pallas_padded.1']
    #allocation4 [shape = 'u8[524288]{0}', space=vmem, size = 0x80000, scoped, tag = 'input window, operand 1, single buffered']
    #allocation5 [shape = 's32[1]{0}', space=sflag, size = 0x4, scoped, tag = 'scoped memory for _linear_pallas_padded.1']
    #allocation6 [shape = 'u8[512]{0}', space=vmem, size = 0x400, scoped, tag = 'input window, operand 2, single buffered']
    %8 = vsyncpa [#allocation3], 0
    %s9 = scalar_lea.sflag [#allocation3], 1
    %10 = vsyncpa %s9, 0
    %11 = vsyncpa [#allocation5], 0
    loop: start=0, step=1, limit=4
    $region2: #{_linear_pallas_padded.1} parent=1 // loop_pre_header
      _
    $region3: #{_linear_pallas_padded.1} parent=1 // loop_header
      %s13 = sphi 0, %s17
      %p14 = scmp.ge.s32.totalorder %s13, 4
      %s23 = sphi 0, %s25
      %s26 = sphi 0, %s23
      %s27 = sphi 0, %s26
      %s43 = sphi 0, %s27
      %s47 = sphi 0, %s47
      %s49 = sphi 0, %s47
      %s50 = sphi 0, %s49
      %s64 = sphi 0, %s50
      %s68 = sphi 0, %s68
      %s70 = sphi 0, %s68
      %s71 = sphi 0, %s70
      %s85 = sphi 0, %s71
      %s91 = sphi 0, %s93
      %s94 = sphi 0, %s91
      %s95 = sphi 0, %s94
      %s111 = sphi 0, %s95
    $region4: #{_linear_pallas_padded.1} parent=1 // loop_header_branch
      %16 = sbr.rel (%p14) target = $region8
    $region5: #{_linear_pallas_padded.1} parent=1 // loop_body
      %s18 = ssub.s32 %s13, 1
      %s19 = ssub.s32 %s13, 2
      %s20 = sadd.s32 %s13, 1
      %s21 = ssub.s32 %s13, %s20
      %p22 = scmp.eq.s32.totalorder %s21, 0
      %s24 = sadd.s32 %s23, 1
      %s25 = scalar_select %p22, %s23, %s24
      %p28 = pneg %p22
      %p29 = scmp.eq.s32.totalorder %s13, 1
      %p30 = por %p28, %p29
      %p31 = scmp.ne.s32.totalorder %s23, %s26
      %p32 = scmp.eq.s32.totalorder %s13, 0
      %p33 = por %p31, %p32
      %p34 = scmp.ne.s32.totalorder %s23, %s26
      %p35 = scmp.eq.s32.totalorder %s18, 1
      %p36 = por %p34, %p35
      %p37 = scmp.ne.s32.totalorder %s26, %s27
      %p38 = scmp.eq.s32.totalorder %s18, 0
      %p39 = por %p37, %p38
      %p40 = scmp.ne.s32.totalorder %s26, %s27
      %p41 = scmp.eq.s32.totalorder %s19, 1
      %p42 = por %p40, %p41
      %p44 = scmp.ne.s32.totalorder %s27, %s43
      %p45 = scmp.eq.s32.totalorder %s19, 0
      %p46 = por %p44, %p45
      %s48 = sadd.s32 %s47, 1
      %p51 = scmp.eq.s32.totalorder %s13, 1
      %p52 = scmp.ne.s32.totalorder %s47, %s49
      %p53 = scmp.eq.s32.totalorder %s13, 0
      %p54 = por %p52, %p53
      %p55 = scmp.ne.s32.totalorder %s47, %s49
      %p56 = scmp.eq.s32.totalorder %s18, 1
      %p57 = por %p55, %p56
      %p58 = scmp.ne.s32.totalorder %s49, %s50
      %p59 = scmp.eq.s32.totalorder %s18, 0
      %p60 = por %p58, %p59
      %p61 = scmp.ne.s32.totalorder %s49, %s50
      %p62 = scmp.eq.s32.totalorder %s19, 1
      %p63 = por %p61, %p62
      %p65 = scmp.ne.s32.totalorder %s50, %s64
      %p66 = scmp.eq.s32.totalorder %s19, 0
      %p67 = por %p65, %p66
      %s69 = sadd.s32 %s68, 1
      %p72 = scmp.eq.s32.totalorder %s13, 1
      %p73 = scmp.ne.s32.totalorder %s68, %s70
      %p74 = scmp.eq.s32.totalorder %s13, 0
      %p75 = por %p73, %p74
      %p76 = scmp.ne.s32.totalorder %s68, %s70
      %p77 = scmp.eq.s32.totalorder %s18, 1
      %p78 = por %p76, %p77
      %p79 = scmp.ne.s32.totalorder %s70, %s71
      %p80 = scmp.eq.s32.totalorder %s18, 0
      %p81 = por %p79, %p80
      %p82 = scmp.ne.s32.totalorder %s70, %s71
      %p83 = scmp.eq.s32.totalorder %s19, 1
      %p84 = por %p82, %p83
      %p86 = scmp.ne.s32.totalorder %s71, %s85
      %p87 = scmp.eq.s32.totalorder %s19, 0
      %p88 = por %p86, %p87
      %s89 = ssub.s32 %s13, %s20
      %p90 = scmp.eq.s32.totalorder %s89, 0
      %s92 = sadd.s32 %s91, 1
      %s93 = scalar_select %p90, %s91, %s92
      %p96 = pneg %p90
      %p97 = scmp.eq.s32.totalorder %s13, 1
      %p98 = por %p96, %p97
      %p99 = scmp.ne.s32.totalorder %s91, %s94
      %p100 = scmp.eq.s32.totalorder %s13, 0
      %p101 = por %p99, %p100
      %p102 = scmp.ne.s32.totalorder %s91, %s94
      %p103 = scmp.eq.s32.totalorder %s18, 1
      %p104 = por %p102, %p103
      %p105 = scmp.ne.s32.totalorder %s94, %s95
      %p106 = scmp.eq.s32.totalorder %s18, 0
      %p107 = por %p105, %p106
      %p108 = scmp.ne.s32.totalorder %s94, %s95
      %p109 = scmp.eq.s32.totalorder %s19, 1
      %p110 = por %p108, %p109
      %p112 = scmp.ne.s32.totalorder %s95, %s111
      %p113 = scmp.eq.s32.totalorder %s19, 0
      %p114 = por %p112, %p113
      %p115 = scmp.le.s32.totalorder 1, %s13
      %p116 = scmp.lt.s32.totalorder %s13, 3
      %p117 = pnand %p115, %p116
      %p118 = pneg %p117
      // Predicated region
      $region9: #{_linear_pallas_padded.1} parent=5 // pred_check
        _
      $region10: #{_linear_pallas_padded.1} parent=5 // pred_check_branch
        %120 = sbr.rel (%p117) target = $region12
      $region11: #{_linear_pallas_padded.1} parent=5 // pred_region
        %s121 = ssub.s32 %s13, 1
        // Predicated region
        $region13: #{_linear_pallas_padded.1} parent=11 // pred_check
          %p122 = pneg %p60
        $region14: #{_linear_pallas_padded.1} parent=11 // pred_check_branch
          %124 = sbr.rel (%p122) target = $region16
        $region15: #{_linear_pallas_padded.1} parent=11 // pred_region
          %126 = vsyncadd [#allocation5], 0
          %s127 = sshll.u32 %s1, 4
          %s128 = int_to_ptr.hbm [resolvable:$true] %s127
          %s129 = sshll.u32 [#allocation4], 4
          %s130 = int_to_ptr.vmem [resolvable:$true] %s129
          %135 = dma.hbm_to_vmem [thread:$0]  %s128, 16384, %s130, [#allocation5], 128, 128, 8
        $region16: #{_linear_pallas_padded.1} parent=11 // pred_fallthru
          _
        // Predicated region
        $region17: #{_linear_pallas_padded.1} parent=11 // pred_check
          %p136 = pneg %p81
        $region18: #{_linear_pallas_padded.1} parent=11 // pred_check_branch
          %138 = sbr.rel (%p136) target = $region20
        $region19: #{_linear_pallas_padded.1} parent=11 // pred_region
          %140 = vsyncadd [#allocation5], 0
          %s142 = sshll.u32 %s2, 4
          %s143 = int_to_ptr.hbm [resolvable:$true] %s142
          %s144 = sshll.u32 [#allocation6], 4
          %s145 = int_to_ptr.vmem [resolvable:$true] %s144
          %147 = dma.hbm_to_vmem [thread:$0]  %s143, 16, %s145, [#allocation5]
        $region20: #{_linear_pallas_padded.1} parent=11 // pred_fallthru
          _
      $region12: #{_linear_pallas_padded.1} parent=5 // pred_fallthru
        _
      %p148 = scmp.lt.s32.totalorder %s13, 2
      // Predicated region
      $region21: #{_linear_pallas_padded.1} parent=5 // pred_check
        %p149 = pneg %p148
      $region22: #{_linear_pallas_padded.1} parent=5 // pred_check_branch
        %151 = sbr.rel (%p149) target = $region24
      $region23: #{_linear_pallas_padded.1} parent=5 // pred_region
        // Predicated region
        $region25: #{_linear_pallas_padded.1} parent=23 // pred_check
          %p152 = pneg %p33
        $region26: #{_linear_pallas_padded.1} parent=23 // pred_check_branch
          %154 = sbr.rel (%p152) target = $region28
        $region27: #{_linear_pallas_padded.1} parent=23 // pred_region
          %s155 = sand.u32 %s23, 1
          %s156 = scalar_lea.sflag [#allocation3], %s155
          %s157 = sand.u32 %s23, 1
          %s158 = smul.addr %s157, 4096
          %s159 = scalar_lea.vmem [#allocation2], %s158
          %s160 = smul.u32 64, %s13
          %162 = vsyncadd %s156, 0
          %s163 = smul.addr %s160, 8
          %s164 = smul.addr %s163, 8
          %s165 = scalar_lea.hbm %s0, %s164
          %s166 = sshll.u32 %s165, 4
          %s167 = int_to_ptr.hbm [resolvable:$true] %s166
          %s168 = sshll.u32 %s159, 4
          %s169 = int_to_ptr.vmem [resolvable:$true] %s168
          %174 = dma.hbm_to_vmem [thread:$0]  %s167, 65536, %s169, %s156, 1024, 1024, 64
        $region28: #{_linear_pallas_padded.1} parent=23 // pred_fallthru
          _
      $region24: #{_linear_pallas_padded.1} parent=5 // pred_fallthru
        _
      %p175 = scmp.le.s32.totalorder 1, %s13
      %p176 = scmp.lt.s32.totalorder %s13, 3
      %p177 = pnand %p175, %p176
      %p178 = pneg %p177
      // Predicated region
      $region29: #{_linear_pallas_padded.1} parent=5 // pred_check
        _
      $region30: #{_linear_pallas_padded.1} parent=5 // pred_check_branch
        %180 = sbr.rel (%p177) target = $region32
      $region31: #{_linear_pallas_padded.1} parent=5 // pred_region
        %s181 = ssub.s32 %s13, 1
        %s182 = sand.u32 %s26, 1
        %s183 = scalar_lea.sflag [#allocation3], %s182
        %s184 = sand.u32 %s26, 1
        %s185 = smul.addr %s184, 4096
        %s186 = scalar_lea.vmem [#allocation2], %s185
        // Predicated region
        $region33: #{_linear_pallas_padded.1} parent=31 // pred_check
          %p187 = pneg %p39
        $region34: #{_linear_pallas_padded.1} parent=31 // pred_check_branch
          %189 = sbr.rel (%p187) target = $region36
        $region35: #{_linear_pallas_padded.1} parent=31 // pred_region
          %191 = dma.done %s183, 65536
        $region36: #{_linear_pallas_padded.1} parent=31 // pred_fallthru
          _
        // Predicated region
        $region37: #{_linear_pallas_padded.1} parent=31 // pred_check
          %p192 = pneg %p60
        $region38: #{_linear_pallas_padded.1} parent=31 // pred_check_branch
          %194 = sbr.rel (%p192) target = $region40
        $region39: #{_linear_pallas_padded.1} parent=31 // pred_region
          %196 = dma.done [#allocation5], 16384
        $region40: #{_linear_pallas_padded.1} parent=31 // pred_fallthru
          _
        // Predicated region
        $region41: #{_linear_pallas_padded.1} parent=31 // pred_check
          %p197 = pneg %p81
        $region42: #{_linear_pallas_padded.1} parent=31 // pred_check_branch
          %199 = sbr.rel (%p197) target = $region44
        $region43: #{_linear_pallas_padded.1} parent=31 // pred_region
          %201 = dma.done [#allocation5], 16
        $region44: #{_linear_pallas_padded.1} parent=31 // pred_fallthru
          _
        %s202 = sand.u32 %s26, 1
        %s203 = scalar_lea.sflag [#allocation3], %s202
        %s204 = sand.u32 %s26, 1
        %s205 = smul.addr %s204, 4096
        %s206 = scalar_lea.vmem [#allocation2], %s205
        %p207 = pneg %p39
        %p208 = pneg %p36
        %p209 = pneg %p60
        %p210 = pneg %p57
        %p211 = pneg %p81
        %p212 = pneg %p78
        %p213 = pneg %p107
        %p214 = pneg %p104
        %s215 = smul.u32 64, %s18
        %p216 = scmp.lt.s32.totalorder %s215, 127
        %s217 = scalar_select %p216, %s215, 127
        %s218 = smul.addr %s217, 8
        %s219 = scalar_lea.vmem %s3, %s218
        %s220 = smul.u32 64, %s18
        %s221 = smul.u32 64, %s18
        %p222 = scmp.lt.s32.totalorder %s221, 127
        %s223 = scalar_select %p222, %s221, 127
        %s224 = smul.addr %s223, 8
        %s225 = scalar_lea.vmem %s3, %s224
        %s226 = smul.u32 64, %s18
        %v227 = vld [vmem:[%s186] sm:$0xff]
        %v228 = vld [vmem:[%s186 + $0x8] sm:$0xff]
        %v229 = vld [vmem:[%s186 + $0x10] sm:$0xff]
        %v230 = vld [vmem:[%s186 + $0x18] sm:$0xff]
        %v231 = vld [vmem:[%s186 + $0x20] sm:$0xff]
        %v232 = vld [vmem:[%s186 + $0x28] sm:$0xff]
        %v233 = vld [vmem:[%s186 + $0x30] sm:$0xff]
        %v234 = vld [vmem:[%s186 + $0x38] sm:$0xff]
        %v235 = vld [vmem:[%s186 + $0x40] sm:$0xff]
        %v236 = vld [vmem:[%s186 + $0x48] sm:$0xff]
        %v237 = vld [vmem:[%s186 + $0x50] sm:$0xff]
        %v238 = vld [vmem:[%s186 + $0x58] sm:$0xff]
        %v239 = vld [vmem:[%s186 + $0x60] sm:$0xff]
        %v240 = vld [vmem:[%s186 + $0x68] sm:$0xff]
        %v241 = vld [vmem:[%s186 + $0x70] sm:$0xff]
        %v242 = vld [vmem:[%s186 + $0x78] sm:$0xff]
        %v243 = vld [vmem:[%s186 + $0x80] sm:$0xff]
        %v244 = vld [vmem:[%s186 + $0x88] sm:$0xff]
        %v245 = vld [vmem:[%s186 + $0x90] sm:$0xff]
        %v246 = vld [vmem:[%s186 + $0x98] sm:$0xff]
        %v247 = vld [vmem:[%s186 + $0xa0] sm:$0xff]
        %v248 = vld [vmem:[%s186 + $0xa8] sm:$0xff]
        %v249 = vld [vmem:[%s186 + $0xb0] sm:$0xff]
        %v250 = vld [vmem:[%s186 + $0xb8] sm:$0xff]
        %v251 = vld [vmem:[%s186 + $0xc0] sm:$0xff]
        %v252 = vld [vmem:[%s186 + $0xc8] sm:$0xff]
        %v253 = vld [vmem:[%s186 + $0xd0] sm:$0xff]
        %v254 = vld [vmem:[%s186 + $0xd8] sm:$0xff]
        %v255 = vld [vmem:[%s186 + $0xe0] sm:$0xff]
        %v256 = vld [vmem:[%s186 + $0xe8] sm:$0xff]
        %v257 = vld [vmem:[%s186 + $0xf0] sm:$0xff]
        %v258 = vld [vmem:[%s186 + $0xf8] sm:$0xff]
        %v259 = vld [vmem:[%s186 + $0x100] sm:$0xff]
        %v260 = vld [vmem:[%s186 + $0x108] sm:$0xff]
        %v261 = vld [vmem:[%s186 + $0x110] sm:$0xff]
        %v262 = vld [vmem:[%s186 + $0x118] sm:$0xff]
        %v263 = vld [vmem:[%s186 + $0x120] sm:$0xff]
        %v264 = vld [vmem:[%s186 + $0x128] sm:$0xff]
        %v265 = vld [vmem:[%s186 + $0x130] sm:$0xff]
        %v266 = vld [vmem:[%s186 + $0x138] sm:$0xff]
        %v267 = vld [vmem:[%s186 + $0x140] sm:$0xff]
        %v268 = vld [vmem:[%s186 + $0x148] sm:$0xff]
        %v269 = vld [vmem:[%s186 + $0x150] sm:$0xff]
        %v270 = vld [vmem:[%s186 + $0x158] sm:$0xff]
        %v271 = vld [vmem:[%s186 + $0x160] sm:$0xff]
        %v272 = vld [vmem:[%s186 + $0x168] sm:$0xff]
        %v273 = vld [vmem:[%s186 + $0x170] sm:$0xff]
        %v274 = vld [vmem:[%s186 + $0x178] sm:$0xff]
        %v275 = vld [vmem:[%s186 + $0x180] sm:$0xff]
        %v276 = vld [vmem:[%s186 + $0x188] sm:$0xff]
        %v277 = vld [vmem:[%s186 + $0x190] sm:$0xff]
        %v278 = vld [vmem:[%s186 + $0x198] sm:$0xff]
        %v279 = vld [vmem:[%s186 + $0x1a0] sm:$0xff]
        %v280 = vld [vmem:[%s186 + $0x1a8] sm:$0xff]
        %v281 = vld [vmem:[%s186 + $0x1b0] sm:$0xff]
        %v282 = vld [vmem:[%s186 + $0x1b8] sm:$0xff]
        %v283 = vld [vmem:[%s186 + $0x1c0] sm:$0xff]
        %v284 = vld [vmem:[%s186 + $0x1c8] sm:$0xff]
        %v285 = vld [vmem:[%s186 + $0x1d0] sm:$0xff]
        %v286 = vld [vmem:[%s186 + $0x1d8] sm:$0xff]
        %v287 = vld [vmem:[%s186 + $0x1e0] sm:$0xff]
        %v288 = vld [vmem:[%s186 + $0x1e8] sm:$0xff]
        %v289 = vld [vmem:[%s186 + $0x1f0] sm:$0xff]
        %v290 = vld [vmem:[%s186 + $0x1f8] sm:$0xff]
        %v291 = vld [vmem:[%s186 + $0x200] sm:$0xff]
        %v292 = vld [vmem:[%s186 + $0x208] sm:$0xff]
        %v293 = vld [vmem:[%s186 + $0x210] sm:$0xff]
        %v294 = vld [vmem:[%s186 + $0x218] sm:$0xff]
        %v295 = vld [vmem:[%s186 + $0x220] sm:$0xff]
        %v296 = vld [vmem:[%s186 + $0x228] sm:$0xff]
        %v297 = vld [vmem:[%s186 + $0x230] sm:$0xff]
        %v298 = vld [vmem:[%s186 + $0x238] sm:$0xff]
        %v299 = vld [vmem:[%s186 + $0x240] sm:$0xff]
        %v300 = vld [vmem:[%s186 + $0x248] sm:$0xff]
        %v301 = vld [vmem:[%s186 + $0x250] sm:$0xff]
        %v302 = vld [vmem:[%s186 + $0x258] sm:$0xff]
        %v303 = vld [vmem:[%s186 + $0x260] sm:$0xff]
        %v304 = vld [vmem:[%s186 + $0x268] sm:$0xff]
        %v305 = vld [vmem:[%s186 + $0x270] sm:$0xff]
        %v306 = vld [vmem:[%s186 + $0x278] sm:$0xff]
        %v307 = vld [vmem:[%s186 + $0x280] sm:$0xff]
        %v308 = vld [vmem:[%s186 + $0x288] sm:$0xff]
        %v309 = vld [vmem:[%s186 + $0x290] sm:$0xff]
        %v310 = vld [vmem:[%s186 + $0x298] sm:$0xff]
        %v311 = vld [vmem:[%s186 + $0x2a0] sm:$0xff]
        %v312 = vld [vmem:[%s186 + $0x2a8] sm:$0xff]
        %v313 = vld [vmem:[%s186 + $0x2b0] sm:$0xff]
        %v314 = vld [vmem:[%s186 + $0x2b8] sm:$0xff]
        %v315 = vld [vmem:[%s186 + $0x2c0] sm:$0xff]
        %v316 = vld [vmem:[%s186 + $0x2c8] sm:$0xff]
        %v317 = vld [vmem:[%s186 + $0x2d0] sm:$0xff]
        %v318 = vld [vmem:[%s186 + $0x2d8] sm:$0xff]
        %v319 = vld [vmem:[%s186 + $0x2e0] sm:$0xff]
        %v320 = vld [vmem:[%s186 + $0x2e8] sm:$0xff]
        %v321 = vld [vmem:[%s186 + $0x2f0] sm:$0xff]
        %v322 = vld [vmem:[%s186 + $0x2f8] sm:$0xff]
        %v323 = vld [vmem:[%s186 + $0x300] sm:$0xff]
        %v324 = vld [vmem:[%s186 + $0x308] sm:$0xff]
        %v325 = vld [vmem:[%s186 + $0x310] sm:$0xff]
        %v326 = vld [vmem:[%s186 + $0x318] sm:$0xff]
        %v327 = vld [vmem:[%s186 + $0x320] sm:$0xff]
        %v328 = vld [vmem:[%s186 + $0x328] sm:$0xff]
        %v329 = vld [vmem:[%s186 + $0x330] sm:$0xff]
        %v330 = vld [vmem:[%s186 + $0x338] sm:$0xff]
        %v331 = vld [vmem:[%s186 + $0x340] sm:$0xff]
        %v332 = vld [vmem:[%s186 + $0x348] sm:$0xff]
        %v333 = vld [vmem:[%s186 + $0x350] sm:$0xff]
        %v334 = vld [vmem:[%s186 + $0x358] sm:$0xff]
        %v335 = vld [vmem:[%s186 + $0x360] sm:$0xff]
        %v336 = vld [vmem:[%s186 + $0x368] sm:$0xff]
        %v337 = vld [vmem:[%s186 + $0x370] sm:$0xff]
        %v338 = vld [vmem:[%s186 + $0x378] sm:$0xff]
        %v339 = vld [vmem:[%s186 + $0x380] sm:$0xff]
        %v340 = vld [vmem:[%s186 + $0x388] sm:$0xff]
        %v341 = vld [vmem:[%s186 + $0x390] sm:$0xff]
        %v342 = vld [vmem:[%s186 + $0x398] sm:$0xff]
        %v343 = vld [vmem:[%s186 + $0x3a0] sm:$0xff]
        %v344 = vld [vmem:[%s186 + $0x3a8] sm:$0xff]
        %v345 = vld [vmem:[%s186 + $0x3b0] sm:$0xff]
        %v346 = vld [vmem:[%s186 + $0x3b8] sm:$0xff]
        %v347 = vld [vmem:[%s186 + $0x3c0] sm:$0xff]
        %v348 = vld [vmem:[%s186 + $0x3c8] sm:$0xff]
        %v349 = vld [vmem:[%s186 + $0x3d0] sm:$0xff]
        %v350 = vld [vmem:[%s186 + $0x3d8] sm:$0xff]
        %v351 = vld [vmem:[%s186 + $0x3e0] sm:$0xff]
        %v352 = vld [vmem:[%s186 + $0x3e8] sm:$0xff]
        %v353 = vld [vmem:[%s186 + $0x3f0] sm:$0xff]
        %v354 = vld [vmem:[%s186 + $0x3f8] sm:$0xff]
        %v355 = vld [vmem:[%s186 + $0x400] sm:$0xff]
        %v356 = vld [vmem:[%s186 + $0x408] sm:$0xff]
        %v357 = vld [vmem:[%s186 + $0x410] sm:$0xff]
        %v358 = vld [vmem:[%s186 + $0x418] sm:$0xff]
        %v359 = vld [vmem:[%s186 + $0x420] sm:$0xff]
        %v360 = vld [vmem:[%s186 + $0x428] sm:$0xff]
        %v361 = vld [vmem:[%s186 + $0x430] sm:$0xff]
        %v362 = vld [vmem:[%s186 + $0x438] sm:$0xff]
        %v363 = vld [vmem:[%s186 + $0x440] sm:$0xff]
        %v364 = vld [vmem:[%s186 + $0x448] sm:$0xff]
        %v365 = vld [vmem:[%s186 + $0x450] sm:$0xff]
        %v366 = vld [vmem:[%s186 + $0x458] sm:$0xff]
        %v367 = vld [vmem:[%s186 + $0x460] sm:$0xff]
        %v368 = vld [vmem:[%s186 + $0x468] sm:$0xff]
        %v369 = vld [vmem:[%s186 + $0x470] sm:$0xff]
        %v370 = vld [vmem:[%s186 + $0x478] sm:$0xff]
        %v371 = vld [vmem:[%s186 + $0x480] sm:$0xff]
        %v372 = vld [vmem:[%s186 + $0x488] sm:$0xff]
        %v373 = vld [vmem:[%s186 + $0x490] sm:$0xff]
        %v374 = vld [vmem:[%s186 + $0x498] sm:$0xff]
        %v375 = vld [vmem:[%s186 + $0x4a0] sm:$0xff]
        %v376 = vld [vmem:[%s186 + $0x4a8] sm:$0xff]
        %v377 = vld [vmem:[%s186 + $0x4b0] sm:$0xff]
        %v378 = vld [vmem:[%s186 + $0x4b8] sm:$0xff]
        %v379 = vld [vmem:[%s186 + $0x4c0] sm:$0xff]
        %v380 = vld [vmem:[%s186 + $0x4c8] sm:$0xff]
        %v381 = vld [vmem:[%s186 + $0x4d0] sm:$0xff]
        %v382 = vld [vmem:[%s186 + $0x4d8] sm:$0xff]
        %v383 = vld [vmem:[%s186 + $0x4e0] sm:$0xff]
        %v384 = vld [vmem:[%s186 + $0x4e8] sm:$0xff]
        %v385 = vld [vmem:[%s186 + $0x4f0] sm:$0xff]
        %v386 = vld [vmem:[%s186 + $0x4f8] sm:$0xff]
        %v387 = vld [vmem:[%s186 + $0x500] sm:$0xff]
        %v388 = vld [vmem:[%s186 + $0x508] sm:$0xff]
        %v389 = vld [vmem:[%s186 + $0x510] sm:$0xff]
        %v390 = vld [vmem:[%s186 + $0x518] sm:$0xff]
        %v391 = vld [vmem:[%s186 + $0x520] sm:$0xff]
        %v392 = vld [vmem:[%s186 + $0x528] sm:$0xff]
        %v393 = vld [vmem:[%s186 + $0x530] sm:$0xff]
        %v394 = vld [vmem:[%s186 + $0x538] sm:$0xff]
        %v395 = vld [vmem:[%s186 + $0x540] sm:$0xff]
        %v396 = vld [vmem:[%s186 + $0x548] sm:$0xff]
        %v397 = vld [vmem:[%s186 + $0x550] sm:$0xff]
        %v398 = vld [vmem:[%s186 + $0x558] sm:$0xff]
        %v399 = vld [vmem:[%s186 + $0x560] sm:$0xff]
        %v400 = vld [vmem:[%s186 + $0x568] sm:$0xff]
        %v401 = vld [vmem:[%s186 + $0x570] sm:$0xff]
        %v402 = vld [vmem:[%s186 + $0x578] sm:$0xff]
        %v403 = vld [vmem:[%s186 + $0x580] sm:$0xff]
        %v404 = vld [vmem:[%s186 + $0x588] sm:$0xff]
        %v405 = vld [vmem:[%s186 + $0x590] sm:$0xff]
        %v406 = vld [vmem:[%s186 + $0x598] sm:$0xff]
        %v407 = vld [vmem:[%s186 + $0x5a0] sm:$0xff]
        %v408 = vld [vmem:[%s186 + $0x5a8] sm:$0xff]
        %v409 = vld [vmem:[%s186 + $0x5b0] sm:$0xff]
        %v410 = vld [vmem:[%s186 + $0x5b8] sm:$0xff]
        %v411 = vld [vmem:[%s186 + $0x5c0] sm:$0xff]
        %v412 = vld [vmem:[%s186 + $0x5c8] sm:$0xff]
        %v413 = vld [vmem:[%s186 + $0x5d0] sm:$0xff]
        %v414 = vld [vmem:[%s186 + $0x5d8] sm:$0xff]
        %v415 = vld [vmem:[%s186 + $0x5e0] sm:$0xff]
        %v416 = vld [vmem:[%s186 + $0x5e8] sm:$0xff]
        %v417 = vld [vmem:[%s186 + $0x5f0] sm:$0xff]
        %v418 = vld [vmem:[%s186 + $0x5f8] sm:$0xff]
        %v419 = vld [vmem:[%s186 + $0x600] sm:$0xff]
        %v420 = vld [vmem:[%s186 + $0x608] sm:$0xff]
        %v421 = vld [vmem:[%s186 + $0x610] sm:$0xff]
        %v422 = vld [vmem:[%s186 + $0x618] sm:$0xff]
        %v423 = vld [vmem:[%s186 + $0x620] sm:$0xff]
        %v424 = vld [vmem:[%s186 + $0x628] sm:$0xff]
        %v425 = vld [vmem:[%s186 + $0x630] sm:$0xff]
        %v426 = vld [vmem:[%s186 + $0x638] sm:$0xff]
        %v427 = vld [vmem:[%s186 + $0x640] sm:$0xff]
        %v428 = vld [vmem:[%s186 + $0x648] sm:$0xff]
        %v429 = vld [vmem:[%s186 + $0x650] sm:$0xff]
        %v430 = vld [vmem:[%s186 + $0x658] sm:$0xff]
        %v431 = vld [vmem:[%s186 + $0x660] sm:$0xff]
        %v432 = vld [vmem:[%s186 + $0x668] sm:$0xff]
        %v433 = vld [vmem:[%s186 + $0x670] sm:$0xff]
        %v434 = vld [vmem:[%s186 + $0x678] sm:$0xff]
        %v435 = vld [vmem:[%s186 + $0x680] sm:$0xff]
        %v436 = vld [vmem:[%s186 + $0x688] sm:$0xff]
        %v437 = vld [vmem:[%s186 + $0x690] sm:$0xff]
        %v438 = vld [vmem:[%s186 + $0x698] sm:$0xff]
        %v439 = vld [vmem:[%s186 + $0x6a0] sm:$0xff]
        %v440 = vld [vmem:[%s186 + $0x6a8] sm:$0xff]
        %v441 = vld [vmem:[%s186 + $0x6b0] sm:$0xff]
        %v442 = vld [vmem:[%s186 + $0x6b8] sm:$0xff]
        %v443 = vld [vmem:[%s186 + $0x6c0] sm:$0xff]
        %v444 = vld [vmem:[%s186 + $0x6c8] sm:$0xff]
        %v445 = vld [vmem:[%s186 + $0x6d0] sm:$0xff]
        %v446 = vld [vmem:[%s186 + $0x6d8] sm:$0xff]
        %v447 = vld [vmem:[%s186 + $0x6e0] sm:$0xff]
        %v448 = vld [vmem:[%s186 + $0x6e8] sm:$0xff]
        %v449 = vld [vmem:[%s186 + $0x6f0] sm:$0xff]
        %v450 = vld [vmem:[%s186 + $0x6f8] sm:$0xff]
        %v451 = vld [vmem:[%s186 + $0x700] sm:$0xff]
        %v452 = vld [vmem:[%s186 + $0x708] sm:$0xff]
        %v453 = vld [vmem:[%s186 + $0x710] sm:$0xff]
        %v454 = vld [vmem:[%s186 + $0x718] sm:$0xff]
        %v455 = vld [vmem:[%s186 + $0x720] sm:$0xff]
        %v456 = vld [vmem:[%s186 + $0x728] sm:$0xff]
        %v457 = vld [vmem:[%s186 + $0x730] sm:$0xff]
        %v458 = vld [vmem:[%s186 + $0x738] sm:$0xff]
        %v459 = vld [vmem:[%s186 + $0x740] sm:$0xff]
        %v460 = vld [vmem:[%s186 + $0x748] sm:$0xff]
        %v461 = vld [vmem:[%s186 + $0x750] sm:$0xff]
        %v462 = vld [vmem:[%s186 + $0x758] sm:$0xff]
        %v463 = vld [vmem:[%s186 + $0x760] sm:$0xff]
        %v464 = vld [vmem:[%s186 + $0x768] sm:$0xff]
        %v465 = vld [vmem:[%s186 + $0x770] sm:$0xff]
        %v466 = vld [vmem:[%s186 + $0x778] sm:$0xff]
        %v467 = vld [vmem:[%s186 + $0x780] sm:$0xff]
        %v468 = vld [vmem:[%s186 + $0x788] sm:$0xff]
        %v469 = vld [vmem:[%s186 + $0x790] sm:$0xff]
        %v470 = vld [vmem:[%s186 + $0x798] sm:$0xff]
        %v471 = vld [vmem:[%s186 + $0x7a0] sm:$0xff]
        %v472 = vld [vmem:[%s186 + $0x7a8] sm:$0xff]
        %v473 = vld [vmem:[%s186 + $0x7b0] sm:$0xff]
        %v474 = vld [vmem:[%s186 + $0x7b8] sm:$0xff]
        %v475 = vld [vmem:[%s186 + $0x7c0] sm:$0xff]
        %v476 = vld [vmem:[%s186 + $0x7c8] sm:$0xff]
        %v477 = vld [vmem:[%s186 + $0x7d0] sm:$0xff]
        %v478 = vld [vmem:[%s186 + $0x7d8] sm:$0xff]
        %v479 = vld [vmem:[%s186 + $0x7e0] sm:$0xff]
        %v480 = vld [vmem:[%s186 + $0x7e8] sm:$0xff]
        %v481 = vld [vmem:[%s186 + $0x7f0] sm:$0xff]
        %v482 = vld [vmem:[%s186 + $0x7f8] sm:$0xff]
        %v483 = vld [vmem:[%s186 + $0x800] sm:$0xff]
        %v484 = vld [vmem:[%s186 + $0x808] sm:$0xff]
        %v485 = vld [vmem:[%s186 + $0x810] sm:$0xff]
        %v486 = vld [vmem:[%s186 + $0x818] sm:$0xff]
        %v487 = vld [vmem:[%s186 + $0x820] sm:$0xff]
        %v488 = vld [vmem:[%s186 + $0x828] sm:$0xff]
        %v489 = vld [vmem:[%s186 + $0x830] sm:$0xff]
        %v490 = vld [vmem:[%s186 + $0x838] sm:$0xff]
        %v491 = vld [vmem:[%s186 + $0x840] sm:$0xff]
        %v492 = vld [vmem:[%s186 + $0x848] sm:$0xff]
        %v493 = vld [vmem:[%s186 + $0x850] sm:$0xff]
        %v494 = vld [vmem:[%s186 + $0x858] sm:$0xff]
        %v495 = vld [vmem:[%s186 + $0x860] sm:$0xff]
        %v496 = vld [vmem:[%s186 + $0x868] sm:$0xff]
        %v497 = vld [vmem:[%s186 + $0x870] sm:$0xff]
        %v498 = vld [vmem:[%s186 + $0x878] sm:$0xff]
        %v499 = vld [vmem:[%s186 + $0x880] sm:$0xff]
        %v500 = vld [vmem:[%s186 + $0x888] sm:$0xff]
        %v501 = vld [vmem:[%s186 + $0x890] sm:$0xff]
        %v502 = vld [vmem:[%s186 + $0x898] sm:$0xff]
        %v503 = vld [vmem:[%s186 + $0x8a0] sm:$0xff]
        %v504 = vld [vmem:[%s186 + $0x8a8] sm:$0xff]
        %v505 = vld [vmem:[%s186 + $0x8b0] sm:$0xff]
        %v506 = vld [vmem:[%s186 + $0x8b8] sm:$0xff]
        %v507 = vld [vmem:[%s186 + $0x8c0] sm:$0xff]
        %v508 = vld [vmem:[%s186 + $0x8c8] sm:$0xff]
        %v509 = vld [vmem:[%s186 + $0x8d0] sm:$0xff]
        %v510 = vld [vmem:[%s186 + $0x8d8] sm:$0xff]
        %v511 = vld [vmem:[%s186 + $0x8e0] sm:$0xff]
        %v512 = vld [vmem:[%s186 + $0x8e8] sm:$0xff]
        %v513 = vld [vmem:[%s186 + $0x8f0] sm:$0xff]
        %v514 = vld [vmem:[%s186 + $0x8f8] sm:$0xff]
        %v515 = vld [vmem:[%s186 + $0x900] sm:$0xff]
        %v516 = vld [vmem:[%s186 + $0x908] sm:$0xff]
        %v517 = vld [vmem:[%s186 + $0x910] sm:$0xff]
        %v518 = vld [vmem:[%s186 + $0x918] sm:$0xff]
        %v519 = vld [vmem:[%s186 + $0x920] sm:$0xff]
        %v520 = vld [vmem:[%s186 + $0x928] sm:$0xff]
        %v521 = vld [vmem:[%s186 + $0x930] sm:$0xff]
        %v522 = vld [vmem:[%s186 + $0x938] sm:$0xff]
        %v523 = vld [vmem:[%s186 + $0x940] sm:$0xff]
        %v524 = vld [vmem:[%s186 + $0x948] sm:$0xff]
        %v525 = vld [vmem:[%s186 + $0x950] sm:$0xff]
        %v526 = vld [vmem:[%s186 + $0x958] sm:$0xff]
        %v527 = vld [vmem:[%s186 + $0x960] sm:$0xff]
        %v528 = vld [vmem:[%s186 + $0x968] sm:$0xff]
        %v529 = vld [vmem:[%s186 + $0x970] sm:$0xff]
        %v530 = vld [vmem:[%s186 + $0x978] sm:$0xff]
        %v531 = vld [vmem:[%s186 + $0x980] sm:$0xff]
        %v532 = vld [vmem:[%s186 + $0x988] sm:$0xff]
        %v533 = vld [vmem:[%s186 + $0x990] sm:$0xff]
        %v534 = vld [vmem:[%s186 + $0x998] sm:$0xff]
        %v535 = vld [vmem:[%s186 + $0x9a0] sm:$0xff]
        %v536 = vld [vmem:[%s186 + $0x9a8] sm:$0xff]
        %v537 = vld [vmem:[%s186 + $0x9b0] sm:$0xff]
        %v538 = vld [vmem:[%s186 + $0x9b8] sm:$0xff]
        %v539 = vld [vmem:[%s186 + $0x9c0] sm:$0xff]
        %v540 = vld [vmem:[%s186 + $0x9c8] sm:$0xff]
        %v541 = vld [vmem:[%s186 + $0x9d0] sm:$0xff]
        %v542 = vld [vmem:[%s186 + $0x9d8] sm:$0xff]
        %v543 = vld [vmem:[%s186 + $0x9e0] sm:$0xff]
        %v544 = vld [vmem:[%s186 + $0x9e8] sm:$0xff]
        %v545 = vld [vmem:[%s186 + $0x9f0] sm:$0xff]
        %v546 = vld [vmem:[%s186 + $0x9f8] sm:$0xff]
        %v547 = vld [vmem:[%s186 + $0xa00] sm:$0xff]
        %v548 = vld [vmem:[%s186 + $0xa08] sm:$0xff]
        %v549 = vld [vmem:[%s186 + $0xa10] sm:$0xff]
        %v550 = vld [vmem:[%s186 + $0xa18] sm:$0xff]
        %v551 = vld [vmem:[%s186 + $0xa20] sm:$0xff]
        %v552 = vld [vmem:[%s186 + $0xa28] sm:$0xff]
        %v553 = vld [vmem:[%s186 + $0xa30] sm:$0xff]
        %v554 = vld [vmem:[%s186 + $0xa38] sm:$0xff]
        %v555 = vld [vmem:[%s186 + $0xa40] sm:$0xff]
        %v556 = vld [vmem:[%s186 + $0xa48] sm:$0xff]
        %v557 = vld [vmem:[%s186 + $0xa50] sm:$0xff]
        %v558 = vld [vmem:[%s186 + $0xa58] sm:$0xff]
        %v559 = vld [vmem:[%s186 + $0xa60] sm:$0xff]
        %v560 = vld [vmem:[%s186 + $0xa68] sm:$0xff]
        %v561 = vld [vmem:[%s186 + $0xa70] sm:$0xff]
        %v562 = vld [vmem:[%s186 + $0xa78] sm:$0xff]
        %v563 = vld [vmem:[%s186 + $0xa80] sm:$0xff]
        %v564 = vld [vmem:[%s186 + $0xa88] sm:$0xff]
        %v565 = vld [vmem:[%s186 + $0xa90] sm:$0xff]
        %v566 = vld [vmem:[%s186 + $0xa98] sm:$0xff]
        %v567 = vld [vmem:[%s186 + $0xaa0] sm:$0xff]
        %v568 = vld [vmem:[%s186 + $0xaa8] sm:$0xff]
        %v569 = vld [vmem:[%s186 + $0xab0] sm:$0xff]
        %v570 = vld [vmem:[%s186 + $0xab8] sm:$0xff]
        %v571 = vld [vmem:[%s186 + $0xac0] sm:$0xff]
        %v572 = vld [vmem:[%s186 + $0xac8] sm:$0xff]
        %v573 = vld [vmem:[%s186 + $0xad0] sm:$0xff]
        %v574 = vld [vmem:[%s186 + $0xad8] sm:$0xff]
        %v575 = vld [vmem:[%s186 + $0xae0] sm:$0xff]
        %v576 = vld [vmem:[%s186 + $0xae8] sm:$0xff]
        %v577 = vld [vmem:[%s186 + $0xaf0] sm:$0xff]
        %v578 = vld [vmem:[%s186 + $0xaf8] sm:$0xff]
        %v579 = vld [vmem:[%s186 + $0xb00] sm:$0xff]
        %v580 = vld [vmem:[%s186 + $0xb08] sm:$0xff]
        %v581 = vld [vmem:[%s186 + $0xb10] sm:$0xff]
        %v582 = vld [vmem:[%s186 + $0xb18] sm:$0xff]
        %v583 = vld [vmem:[%s186 + $0xb20] sm:$0xff]
        %v584 = vld [vmem:[%s186 + $0xb28] sm:$0xff]
        %v585 = vld [vmem:[%s186 + $0xb30] sm:$0xff]
        %v586 = vld [vmem:[%s186 + $0xb38] sm:$0xff]
        %v587 = vld [vmem:[%s186 + $0xb40] sm:$0xff]
        %v588 = vld [vmem:[%s186 + $0xb48] sm:$0xff]
        %v589 = vld [vmem:[%s186 + $0xb50] sm:$0xff]
        %v590 = vld [vmem:[%s186 + $0xb58] sm:$0xff]
        %v591 = vld [vmem:[%s186 + $0xb60] sm:$0xff]
        %v592 = vld [vmem:[%s186 + $0xb68] sm:$0xff]
        %v593 = vld [vmem:[%s186 + $0xb70] sm:$0xff]
        %v594 = vld [vmem:[%s186 + $0xb78] sm:$0xff]
        %v595 = vld [vmem:[%s186 + $0xb80] sm:$0xff]
        %v596 = vld [vmem:[%s186 + $0xb88] sm:$0xff]
        %v597 = vld [vmem:[%s186 + $0xb90] sm:$0xff]
        %v598 = vld [vmem:[%s186 + $0xb98] sm:$0xff]
        %v599 = vld [vmem:[%s186 + $0xba0] sm:$0xff]
        %v600 = vld [vmem:[%s186 + $0xba8] sm:$0xff]
        %v601 = vld [vmem:[%s186 + $0xbb0] sm:$0xff]
        %v602 = vld [vmem:[%s186 + $0xbb8] sm:$0xff]
        %v603 = vld [vmem:[%s186 + $0xbc0] sm:$0xff]
        %v604 = vld [vmem:[%s186 + $0xbc8] sm:$0xff]
        %v605 = vld [vmem:[%s186 + $0xbd0] sm:$0xff]
        %v606 = vld [vmem:[%s186 + $0xbd8] sm:$0xff]
        %v607 = vld [vmem:[%s186 + $0xbe0] sm:$0xff]
        %v608 = vld [vmem:[%s186 + $0xbe8] sm:$0xff]
        %v609 = vld [vmem:[%s186 + $0xbf0] sm:$0xff]
        %v610 = vld [vmem:[%s186 + $0xbf8] sm:$0xff]
        %v611 = vld [vmem:[%s186 + $0xc00] sm:$0xff]
        %v612 = vld [vmem:[%s186 + $0xc08] sm:$0xff]
        %v613 = vld [vmem:[%s186 + $0xc10] sm:$0xff]
        %v614 = vld [vmem:[%s186 + $0xc18] sm:$0xff]
        %v615 = vld [vmem:[%s186 + $0xc20] sm:$0xff]
        %v616 = vld [vmem:[%s186 + $0xc28] sm:$0xff]
        %v617 = vld [vmem:[%s186 + $0xc30] sm:$0xff]
        %v618 = vld [vmem:[%s186 + $0xc38] sm:$0xff]
        %v619 = vld [vmem:[%s186 + $0xc40] sm:$0xff]
        %v620 = vld [vmem:[%s186 + $0xc48] sm:$0xff]
        %v621 = vld [vmem:[%s186 + $0xc50] sm:$0xff]
        %v622 = vld [vmem:[%s186 + $0xc58] sm:$0xff]
        %v623 = vld [vmem:[%s186 + $0xc60] sm:$0xff]
        %v624 = vld [vmem:[%s186 + $0xc68] sm:$0xff]
        %v625 = vld [vmem:[%s186 + $0xc70] sm:$0xff]
        %v626 = vld [vmem:[%s186 + $0xc78] sm:$0xff]
        %v627 = vld [vmem:[%s186 + $0xc80] sm:$0xff]
        %v628 = vld [vmem:[%s186 + $0xc88] sm:$0xff]
        %v629 = vld [vmem:[%s186 + $0xc90] sm:$0xff]
        %v630 = vld [vmem:[%s186 + $0xc98] sm:$0xff]
        %v631 = vld [vmem:[%s186 + $0xca0] sm:$0xff]
        %v632 = vld [vmem:[%s186 + $0xca8] sm:$0xff]
        %v633 = vld [vmem:[%s186 + $0xcb0] sm:$0xff]
        %v634 = vld [vmem:[%s186 + $0xcb8] sm:$0xff]
        %v635 = vld [vmem:[%s186 + $0xcc0] sm:$0xff]
        %v636 = vld [vmem:[%s186 + $0xcc8] sm:$0xff]
        %v637 = vld [vmem:[%s186 + $0xcd0] sm:$0xff]
        %v638 = vld [vmem:[%s186 + $0xcd8] sm:$0xff]
        %v639 = vld [vmem:[%s186 + $0xce0] sm:$0xff]
        %v640 = vld [vmem:[%s186 + $0xce8] sm:$0xff]
        %v641 = vld [vmem:[%s186 + $0xcf0] sm:$0xff]
        %v642 = vld [vmem:[%s186 + $0xcf8] sm:$0xff]
        %v643 = vld [vmem:[%s186 + $0xd00] sm:$0xff]
        %v644 = vld [vmem:[%s186 + $0xd08] sm:$0xff]
        %v645 = vld [vmem:[%s186 + $0xd10] sm:$0xff]
        %v646 = vld [vmem:[%s186 + $0xd18] sm:$0xff]
        %v647 = vld [vmem:[%s186 + $0xd20] sm:$0xff]
        %v648 = vld [vmem:[%s186 + $0xd28] sm:$0xff]
        %v649 = vld [vmem:[%s186 + $0xd30] sm:$0xff]
        %v650 = vld [vmem:[%s186 + $0xd38] sm:$0xff]
        %v651 = vld [vmem:[%s186 + $0xd40] sm:$0xff]
        %v652 = vld [vmem:[%s186 + $0xd48] sm:$0xff]
        %v653 = vld [vmem:[%s186 + $0xd50] sm:$0xff]
        %v654 = vld [vmem:[%s186 + $0xd58] sm:$0xff]
        %v655 = vld [vmem:[%s186 + $0xd60] sm:$0xff]
        %v656 = vld [vmem:[%s186 + $0xd68] sm:$0xff]
        %v657 = vld [vmem:[%s186 + $0xd70] sm:$0xff]
        %v658 = vld [vmem:[%s186 + $0xd78] sm:$0xff]
        %v659 = vld [vmem:[%s186 + $0xd80] sm:$0xff]
        %v660 = vld [vmem:[%s186 + $0xd88] sm:$0xff]
        %v661 = vld [vmem:[%s186 + $0xd90] sm:$0xff]
        %v662 = vld [vmem:[%s186 + $0xd98] sm:$0xff]
        %v663 = vld [vmem:[%s186 + $0xda0] sm:$0xff]
        %v664 = vld [vmem:[%s186 + $0xda8] sm:$0xff]
        %v665 = vld [vmem:[%s186 + $0xdb0] sm:$0xff]
        %v666 = vld [vmem:[%s186 + $0xdb8] sm:$0xff]
        %v667 = vld [vmem:[%s186 + $0xdc0] sm:$0xff]
        %v668 = vld [vmem:[%s186 + $0xdc8] sm:$0xff]
        %v669 = vld [vmem:[%s186 + $0xdd0] sm:$0xff]
        %v670 = vld [vmem:[%s186 + $0xdd8] sm:$0xff]
        %v671 = vld [vmem:[%s186 + $0xde0] sm:$0xff]
        %v672 = vld [vmem:[%s186 + $0xde8] sm:$0xff]
        %v673 = vld [vmem:[%s186 + $0xdf0] sm:$0xff]
        %v674 = vld [vmem:[%s186 + $0xdf8] sm:$0xff]
        %v675 = vld [vmem:[%s186 + $0xe00] sm:$0xff]
        %v676 = vld [vmem:[%s186 + $0xe08] sm:$0xff]
        %v677 = vld [vmem:[%s186 + $0xe10] sm:$0xff]
        %v678 = vld [vmem:[%s186 + $0xe18] sm:$0xff]
        %v679 = vld [vmem:[%s186 + $0xe20] sm:$0xff]
        %v680 = vld [vmem:[%s186 + $0xe28] sm:$0xff]
        %v681 = vld [vmem:[%s186 + $0xe30] sm:$0xff]
        %v682 = vld [vmem:[%s186 + $0xe38] sm:$0xff]
        %v683 = vld [vmem:[%s186 + $0xe40] sm:$0xff]
        %v684 = vld [vmem:[%s186 + $0xe48] sm:$0xff]
        %v685 = vld [vmem:[%s186 + $0xe50] sm:$0xff]
        %v686 = vld [vmem:[%s186 + $0xe58] sm:$0xff]
        %v687 = vld [vmem:[%s186 + $0xe60] sm:$0xff]
        %v688 = vld [vmem:[%s186 + $0xe68] sm:$0xff]
        %v689 = vld [vmem:[%s186 + $0xe70] sm:$0xff]
        %v690 = vld [vmem:[%s186 + $0xe78] sm:$0xff]
        %v691 = vld [vmem:[%s186 + $0xe80] sm:$0xff]
        %v692 = vld [vmem:[%s186 + $0xe88] sm:$0xff]
        %v693 = vld [vmem:[%s186 + $0xe90] sm:$0xff]
        %v694 = vld [vmem:[%s186 + $0xe98] sm:$0xff]
        %v695 = vld [vmem:[%s186 + $0xea0] sm:$0xff]
        %v696 = vld [vmem:[%s186 + $0xea8] sm:$0xff]
        %v697 = vld [vmem:[%s186 + $0xeb0] sm:$0xff]
        %v698 = vld [vmem:[%s186 + $0xeb8] sm:$0xff]
        %v699 = vld [vmem:[%s186 + $0xec0] sm:$0xff]
        %v700 = vld [vmem:[%s186 + $0xec8] sm:$0xff]
        %v701 = vld [vmem:[%s186 + $0xed0] sm:$0xff]
        %v702 = vld [vmem:[%s186 + $0xed8] sm:$0xff]
        %v703 = vld [vmem:[%s186 + $0xee0] sm:$0xff]
        %v704 = vld [vmem:[%s186 + $0xee8] sm:$0xff]
        %v705 = vld [vmem:[%s186 + $0xef0] sm:$0xff]
        %v706 = vld [vmem:[%s186 + $0xef8] sm:$0xff]
        %v707 = vld [vmem:[%s186 + $0xf00] sm:$0xff]
        %v708 = vld [vmem:[%s186 + $0xf08] sm:$0xff]
        %v709 = vld [vmem:[%s186 + $0xf10] sm:$0xff]
        %v710 = vld [vmem:[%s186 + $0xf18] sm:$0xff]
        %v711 = vld [vmem:[%s186 + $0xf20] sm:$0xff]
        %v712 = vld [vmem:[%s186 + $0xf28] sm:$0xff]
        %v713 = vld [vmem:[%s186 + $0xf30] sm:$0xff]
        %v714 = vld [vmem:[%s186 + $0xf38] sm:$0xff]
        %v715 = vld [vmem:[%s186 + $0xf40] sm:$0xff]
        %v716 = vld [vmem:[%s186 + $0xf48] sm:$0xff]
        %v717 = vld [vmem:[%s186 + $0xf50] sm:$0xff]
        %v718 = vld [vmem:[%s186 + $0xf58] sm:$0xff]
        %v719 = vld [vmem:[%s186 + $0xf60] sm:$0xff]
        %v720 = vld [vmem:[%s186 + $0xf68] sm:$0xff]
        %v721 = vld [vmem:[%s186 + $0xf70] sm:$0xff]
        %v722 = vld [vmem:[%s186 + $0xf78] sm:$0xff]
        %v723 = vld [vmem:[%s186 + $0xf80] sm:$0xff]
        %v724 = vld [vmem:[%s186 + $0xf88] sm:$0xff]
        %v725 = vld [vmem:[%s186 + $0xf90] sm:$0xff]
        %v726 = vld [vmem:[%s186 + $0xf98] sm:$0xff]
        %v727 = vld [vmem:[%s186 + $0xfa0] sm:$0xff]
        %v728 = vld [vmem:[%s186 + $0xfa8] sm:$0xff]
        %v729 = vld [vmem:[%s186 + $0xfb0] sm:$0xff]
        %v730 = vld [vmem:[%s186 + $0xfb8] sm:$0xff]
        %v731 = vld [vmem:[%s186 + $0xfc0] sm:$0xff]
        %v732 = vld [vmem:[%s186 + $0xfc8] sm:$0xff]
        %v733 = vld [vmem:[%s186 + $0xfd0] sm:$0xff]
        %v734 = vld [vmem:[%s186 + $0xfd8] sm:$0xff]
        %v735 = vld [vmem:[%s186 + $0xfe0] sm:$0xff]
        %v736 = vld [vmem:[%s186 + $0xfe8] sm:$0xff]
        %v737 = vld [vmem:[%s186 + $0xff0] sm:$0xff]
        %v738 = vld [vmem:[%s186 + $0xff8] sm:$0xff]
        %v739 = vld [vmem:[#allocation4] sm:$0xff]
        %v740 = vld [vmem:[#allocation4 + $0x8] sm:$0xff]
        %v741 = vld [vmem:[#allocation4 + $0x10] sm:$0xff]
        %v742 = vld [vmem:[#allocation4 + $0x18] sm:$0xff]
        %v743 = vld [vmem:[#allocation4 + $0x20] sm:$0xff]
        %v744 = vld [vmem:[#allocation4 + $0x28] sm:$0xff]
        %v745 = vld [vmem:[#allocation4 + $0x30] sm:$0xff]
        %v746 = vld [vmem:[#allocation4 + $0x38] sm:$0xff]
        %v747 = vld [vmem:[#allocation4 + $0x40] sm:$0xff]
        %v748 = vld [vmem:[#allocation4 + $0x48] sm:$0xff]
        %v749 = vld [vmem:[#allocation4 + $0x50] sm:$0xff]
        %v750 = vld [vmem:[#allocation4 + $0x58] sm:$0xff]
        %v751 = vld [vmem:[#allocation4 + $0x60] sm:$0xff]
        %v752 = vld [vmem:[#allocation4 + $0x68] sm:$0xff]
        %v753 = vld [vmem:[#allocation4 + $0x70] sm:$0xff]
        %v754 = vld [vmem:[#allocation4 + $0x78] sm:$0xff]
        %v755 = vld [vmem:[#allocation4 + $0x80] sm:$0xff]
        %v756 = vld [vmem:[#allocation4 + $0x88] sm:$0xff]
        %v757 = vld [vmem:[#allocation4 + $0x90] sm:$0xff]
        %v758 = vld [vmem:[#allocation4 + $0x98] sm:$0xff]
        %v759 = vld [vmem:[#allocation4 + $0xa0] sm:$0xff]
        %v760 = vld [vmem:[#allocation4 + $0xa8] sm:$0xff]
        %v761 = vld [vmem:[#allocation4 + $0xb0] sm:$0xff]
        %v762 = vld [vmem:[#allocation4 + $0xb8] sm:$0xff]
        %v763 = vld [vmem:[#allocation4 + $0xc0] sm:$0xff]
        %v764 = vld [vmem:[#allocation4 + $0xc8] sm:$0xff]
        %v765 = vld [vmem:[#allocation4 + $0xd0] sm:$0xff]
        %v766 = vld [vmem:[#allocation4 + $0xd8] sm:$0xff]
        %v767 = vld [vmem:[#allocation4 + $0xe0] sm:$0xff]
        %v768 = vld [vmem:[#allocation4 + $0xe8] sm:$0xff]
        %v769 = vld [vmem:[#allocation4 + $0xf0] sm:$0xff]
        %v770 = vld [vmem:[#allocation4 + $0xf8] sm:$0xff]
        %v771 = vld [vmem:[#allocation4 + $0x100] sm:$0xff]
        %v772 = vld [vmem:[#allocation4 + $0x108] sm:$0xff]
        %v773 = vld [vmem:[#allocation4 + $0x110] sm:$0xff]
        %v774 = vld [vmem:[#allocation4 + $0x118] sm:$0xff]
        %v775 = vld [vmem:[#allocation4 + $0x120] sm:$0xff]
        %v776 = vld [vmem:[#allocation4 + $0x128] sm:$0xff]
        %v777 = vld [vmem:[#allocation4 + $0x130] sm:$0xff]
        %v778 = vld [vmem:[#allocation4 + $0x138] sm:$0xff]
        %v779 = vld [vmem:[#allocation4 + $0x140] sm:$0xff]
        %v780 = vld [vmem:[#allocation4 + $0x148] sm:$0xff]
        %v781 = vld [vmem:[#allocation4 + $0x150] sm:$0xff]
        %v782 = vld [vmem:[#allocation4 + $0x158] sm:$0xff]
        %v783 = vld [vmem:[#allocation4 + $0x160] sm:$0xff]
        %v784 = vld [vmem:[#allocation4 + $0x168] sm:$0xff]
        %v785 = vld [vmem:[#allocation4 + $0x170] sm:$0xff]
        %v786 = vld [vmem:[#allocation4 + $0x178] sm:$0xff]
        %v787 = vld [vmem:[#allocation4 + $0x180] sm:$0xff]
        %v788 = vld [vmem:[#allocation4 + $0x188] sm:$0xff]
        %v789 = vld [vmem:[#allocation4 + $0x190] sm:$0xff]
        %v790 = vld [vmem:[#allocation4 + $0x198] sm:$0xff]
        %v791 = vld [vmem:[#allocation4 + $0x1a0] sm:$0xff]
        %v792 = vld [vmem:[#allocation4 + $0x1a8] sm:$0xff]
        %v793 = vld [vmem:[#allocation4 + $0x1b0] sm:$0xff]
        %v794 = vld [vmem:[#allocation4 + $0x1b8] sm:$0xff]
        %v795 = vld [vmem:[#allocation4 + $0x1c0] sm:$0xff]
        %v796 = vld [vmem:[#allocation4 + $0x1c8] sm:$0xff]
        %v797 = vld [vmem:[#allocation4 + $0x1d0] sm:$0xff]
        %v798 = vld [vmem:[#allocation4 + $0x1d8] sm:$0xff]
        %v799 = vld [vmem:[#allocation4 + $0x1e0] sm:$0xff]
        %v800 = vld [vmem:[#allocation4 + $0x1e8] sm:$0xff]
        %v801 = vld [vmem:[#allocation4 + $0x1f0] sm:$0xff]
        %v802 = vld [vmem:[#allocation4 + $0x1f8] sm:$0xff]
        %v803 = vld [vmem:[#allocation4 + $0x200] sm:$0xff]
        %v804 = vld [vmem:[#allocation4 + $0x208] sm:$0xff]
        %v805 = vld [vmem:[#allocation4 + $0x210] sm:$0xff]
        %v806 = vld [vmem:[#allocation4 + $0x218] sm:$0xff]
        %v807 = vld [vmem:[#allocation4 + $0x220] sm:$0xff]
        %v808 = vld [vmem:[#allocation4 + $0x228] sm:$0xff]
        %v809 = vld [vmem:[#allocation4 + $0x230] sm:$0xff]
        %v810 = vld [vmem:[#allocation4 + $0x238] sm:$0xff]
        %v811 = vld [vmem:[#allocation4 + $0x240] sm:$0xff]
        %v812 = vld [vmem:[#allocation4 + $0x248] sm:$0xff]
        %v813 = vld [vmem:[#allocation4 + $0x250] sm:$0xff]
        %v814 = vld [vmem:[#allocation4 + $0x258] sm:$0xff]
        %v815 = vld [vmem:[#allocation4 + $0x260] sm:$0xff]
        %v816 = vld [vmem:[#allocation4 + $0x268] sm:$0xff]
        %v817 = vld [vmem:[#allocation4 + $0x270] sm:$0xff]
        %v818 = vld [vmem:[#allocation4 + $0x278] sm:$0xff]
        %v819 = vld [vmem:[#allocation4 + $0x280] sm:$0xff]
        %v820 = vld [vmem:[#allocation4 + $0x288] sm:$0xff]
        %v821 = vld [vmem:[#allocation4 + $0x290] sm:$0xff]
        %v822 = vld [vmem:[#allocation4 + $0x298] sm:$0xff]
        %v823 = vld [vmem:[#allocation4 + $0x2a0] sm:$0xff]
        %v824 = vld [vmem:[#allocation4 + $0x2a8] sm:$0xff]
        %v825 = vld [vmem:[#allocation4 + $0x2b0] sm:$0xff]
        %v826 = vld [vmem:[#allocation4 + $0x2b8] sm:$0xff]
        %v827 = vld [vmem:[#allocation4 + $0x2c0] sm:$0xff]
        %v828 = vld [vmem:[#allocation4 + $0x2c8] sm:$0xff]
        %v829 = vld [vmem:[#allocation4 + $0x2d0] sm:$0xff]
        %v830 = vld [vmem:[#allocation4 + $0x2d8] sm:$0xff]
        %v831 = vld [vmem:[#allocation4 + $0x2e0] sm:$0xff]
        %v832 = vld [vmem:[#allocation4 + $0x2e8] sm:$0xff]
        %v833 = vld [vmem:[#allocation4 + $0x2f0] sm:$0xff]
        %v834 = vld [vmem:[#allocation4 + $0x2f8] sm:$0xff]
        %v835 = vld [vmem:[#allocation4 + $0x300] sm:$0xff]
        %v836 = vld [vmem:[#allocation4 + $0x308] sm:$0xff]
        %v837 = vld [vmem:[#allocation4 + $0x310] sm:$0xff]
        %v838 = vld [vmem:[#allocation4 + $0x318] sm:$0xff]
        %v839 = vld [vmem:[#allocation4 + $0x320] sm:$0xff]
        %v840 = vld [vmem:[#allocation4 + $0x328] sm:$0xff]
        %v841 = vld [vmem:[#allocation4 + $0x330] sm:$0xff]
        %v842 = vld [vmem:[#allocation4 + $0x338] sm:$0xff]
        %v843 = vld [vmem:[#allocation4 + $0x340] sm:$0xff]
        %v844 = vld [vmem:[#allocation4 + $0x348] sm:$0xff]
        %v845 = vld [vmem:[#allocation4 + $0x350] sm:$0xff]
        %v846 = vld [vmem:[#allocation4 + $0x358] sm:$0xff]
        %v847 = vld [vmem:[#allocation4 + $0x360] sm:$0xff]
        %v848 = vld [vmem:[#allocation4 + $0x368] sm:$0xff]
        %v849 = vld [vmem:[#allocation4 + $0x370] sm:$0xff]
        %v850 = vld [vmem:[#allocation4 + $0x378] sm:$0xff]
        %v851 = vld [vmem:[#allocation4 + $0x380] sm:$0xff]
        %v852 = vld [vmem:[#allocation4 + $0x388] sm:$0xff]
        %v853 = vld [vmem:[#allocation4 + $0x390] sm:$0xff]
        %v854 = vld [vmem:[#allocation4 + $0x398] sm:$0xff]
        %v855 = vld [vmem:[#allocation4 + $0x3a0] sm:$0xff]
        %v856 = vld [vmem:[#allocation4 + $0x3a8] sm:$0xff]
        %v857 = vld [vmem:[#allocation4 + $0x3b0] sm:$0xff]
        %v858 = vld [vmem:[#allocation4 + $0x3b8] sm:$0xff]
        %v859 = vld [vmem:[#allocation4 + $0x3c0] sm:$0xff]
        %v860 = vld [vmem:[#allocation4 + $0x3c8] sm:$0xff]
        %v861 = vld [vmem:[#allocation4 + $0x3d0] sm:$0xff]
        %v862 = vld [vmem:[#allocation4 + $0x3d8] sm:$0xff]
        %v863 = vld [vmem:[#allocation4 + $0x3e0] sm:$0xff]
        %v864 = vld [vmem:[#allocation4 + $0x3e8] sm:$0xff]
        %v865 = vld [vmem:[#allocation4 + $0x3f0] sm:$0xff]
        %v866 = vld [vmem:[#allocation4 + $0x3f8] sm:$0xff]
        %v867 = vld [vmem:[#allocation6] sm:$0x1]
        %v869 = vperm.slane %v867, 0
        %871 = vmatpush.msra.mxu0 %v754
        %872 = vmatpush.msra.mxu0 %v753
        %873 = vmatpush.msra.mxu0 %v752
        %874 = vmatpush.msra.mxu0 %v751
        %875 = vmatpush.msra.mxu0 %v750
        %876 = vmatpush.msra.mxu0 %v749
        %877 = vmatpush.msra.mxu0 %v748
        %878 = vmatpush.msra.mxu0 %v747
        %879 = vmatpush.msra.mxu0 %v746
        %880 = vmatpush.msra.mxu0 %v745
        %881 = vmatpush.msra.mxu0 %v744
        %882 = vmatpush.msra.mxu0 %v743
        %883 = vmatpush.msra.mxu0 %v742
        %884 = vmatpush.msra.mxu0 %v741
        %885 = vmatpush.msra.mxu0 %v740
        %886 = vmatpush.msra.mxu0 %v739
        %887 = vmatmul.f32.gmra.mxu0 %v227
        %v888 = vpop.f32.mrf.mxu0
        %v889 = vadd.f32 %v869, %v888
        %890 = vmatmul.f32.gmra.mxu0 %v235
        %v891 = vpop.f32.mrf.mxu0
        %v892 = vadd.f32 %v869, %v891
        %893 = vmatmul.f32.gmra.mxu0 %v243
        %v894 = vpop.f32.mrf.mxu0
        %v895 = vadd.f32 %v869, %v894
        %896 = vmatmul.f32.gmra.mxu0 %v251
        %v897 = vpop.f32.mrf.mxu0
        %v898 = vadd.f32 %v869, %v897
        %899 = vmatmul.f32.gmra.mxu0 %v259
        %v900 = vpop.f32.mrf.mxu0
        %v901 = vadd.f32 %v869, %v900
        %902 = vmatmul.f32.gmra.mxu0 %v267
        %v903 = vpop.f32.mrf.mxu0
        %v904 = vadd.f32 %v869, %v903
        %905 = vmatmul.f32.gmra.mxu0 %v275
        %v906 = vpop.f32.mrf.mxu0
        %v907 = vadd.f32 %v869, %v906
        %908 = vmatmul.f32.gmra.mxu0 %v283
        %v909 = vpop.f32.mrf.mxu0
        %v910 = vadd.f32 %v869, %v909
        %911 = vmatmul.f32.gmra.mxu0 %v291
        %v912 = vpop.f32.mrf.mxu0
        %v913 = vadd.f32 %v869, %v912
        %914 = vmatmul.f32.gmra.mxu0 %v299
        %v915 = vpop.f32.mrf.mxu0
        %v916 = vadd.f32 %v869, %v915
        %917 = vmatmul.f32.gmra.mxu0 %v307
        %v918 = vpop.f32.mrf.mxu0
        %v919 = vadd.f32 %v869, %v918
        %920 = vmatmul.f32.gmra.mxu0 %v315
        %v921 = vpop.f32.mrf.mxu0
        %v922 = vadd.f32 %v869, %v921
        %923 = vmatmul.f32.gmra.mxu0 %v323
        %v924 = vpop.f32.mrf.mxu0
        %v925 = vadd.f32 %v869, %v924
        %926 = vmatmul.f32.gmra.mxu0 %v331
        %v927 = vpop.f32.mrf.mxu0
        %v928 = vadd.f32 %v869, %v927
        %929 = vmatmul.f32.gmra.mxu0 %v339
        %v930 = vpop.f32.mrf.mxu0
        %v931 = vadd.f32 %v869, %v930
        %932 = vmatmul.f32.gmra.mxu0 %v347
        %v933 = vpop.f32.mrf.mxu0
        %v934 = vadd.f32 %v869, %v933
        %935 = vmatmul.f32.gmra.mxu0 %v355
        %v936 = vpop.f32.mrf.mxu0
        %v937 = vadd.f32 %v869, %v936
        %938 = vmatmul.f32.gmra.mxu0 %v363
        %v939 = vpop.f32.mrf.mxu0
        %v940 = vadd.f32 %v869, %v939
        %941 = vmatmul.f32.gmra.mxu0 %v371
        %v942 = vpop.f32.mrf.mxu0
        %v943 = vadd.f32 %v869, %v942
        %944 = vmatmul.f32.gmra.mxu0 %v379
        %v945 = vpop.f32.mrf.mxu0
        %v946 = vadd.f32 %v869, %v945
        %947 = vmatmul.f32.gmra.mxu0 %v387
        %v948 = vpop.f32.mrf.mxu0
        %v949 = vadd.f32 %v869, %v948
        %950 = vmatmul.f32.gmra.mxu0 %v395
        %v951 = vpop.f32.mrf.mxu0
        %v952 = vadd.f32 %v869, %v951
        %953 = vmatmul.f32.gmra.mxu0 %v403
        %v954 = vpop.f32.mrf.mxu0
        %v955 = vadd.f32 %v869, %v954
        %956 = vmatmul.f32.gmra.mxu0 %v411
        %v957 = vpop.f32.mrf.mxu0
        %v958 = vadd.f32 %v869, %v957
        %959 = vmatmul.f32.gmra.mxu0 %v419
        %v960 = vpop.f32.mrf.mxu0
        %v961 = vadd.f32 %v869, %v960
        %962 = vmatmul.f32.gmra.mxu0 %v427
        %v963 = vpop.f32.mrf.mxu0
        %v964 = vadd.f32 %v869, %v963
        %965 = vmatmul.f32.gmra.mxu0 %v435
        %v966 = vpop.f32.mrf.mxu0
        %v967 = vadd.f32 %v869, %v966
        %968 = vmatmul.f32.gmra.mxu0 %v443
        %v969 = vpop.f32.mrf.mxu0
        %v970 = vadd.f32 %v869, %v969
        %971 = vmatmul.f32.gmra.mxu0 %v451
        %v972 = vpop.f32.mrf.mxu0
        %v973 = vadd.f32 %v869, %v972
        %974 = vmatmul.f32.gmra.mxu0 %v459
        %v975 = vpop.f32.mrf.mxu0
        %v976 = vadd.f32 %v869, %v975
        %977 = vmatmul.f32.gmra.mxu0 %v467
        %v978 = vpop.f32.mrf.mxu0
        %v979 = vadd.f32 %v869, %v978
        %980 = vmatmul.f32.gmra.mxu0 %v475
        %v981 = vpop.f32.mrf.mxu0
        %v982 = vadd.f32 %v869, %v981
        %983 = vmatmul.f32.gmra.mxu0 %v483
        %v984 = vpop.f32.mrf.mxu0
        %v985 = vadd.f32 %v869, %v984
        %986 = vmatmul.f32.gmra.mxu0 %v491
        %v987 = vpop.f32.mrf.mxu0
        %v988 = vadd.f32 %v869, %v987
        %989 = vmatmul.f32.gmra.mxu0 %v499
        %v990 = vpop.f32.mrf.mxu0
        %v991 = vadd.f32 %v869, %v990
        %992 = vmatmul.f32.gmra.mxu0 %v507
        %v993 = vpop.f32.mrf.mxu0
        %v994 = vadd.f32 %v869, %v993
        %995 = vmatmul.f32.gmra.mxu0 %v515
        %v996 = vpop.f32.mrf.mxu0
        %v997 = vadd.f32 %v869, %v996
        %998 = vmatmul.f32.gmra.mxu0 %v523
        %v999 = vpop.f32.mrf.mxu0
        %v1000 = vadd.f32 %v869, %v999
        %1001 = vmatmul.f32.gmra.mxu0 %v531
        %v1002 = vpop.f32.mrf.mxu0
        %v1003 = vadd.f32 %v869, %v1002
        %1004 = vmatmul.f32.gmra.mxu0 %v539
        %v1005 = vpop.f32.mrf.mxu0
        %v1006 = vadd.f32 %v869, %v1005
        %1007 = vmatmul.f32.gmra.mxu0 %v547
        %v1008 = vpop.f32.mrf.mxu0
        %v1009 = vadd.f32 %v869, %v1008
        %1010 = vmatmul.f32.gmra.mxu0 %v555
        %v1011 = vpop.f32.mrf.mxu0
        %v1012 = vadd.f32 %v869, %v1011
        %1013 = vmatmul.f32.gmra.mxu0 %v563
        %v1014 = vpop.f32.mrf.mxu0
        %v1015 = vadd.f32 %v869, %v1014
        %1016 = vmatmul.f32.gmra.mxu0 %v571
        %v1017 = vpop.f32.mrf.mxu0
        %v1018 = vadd.f32 %v869, %v1017
        %1019 = vmatmul.f32.gmra.mxu0 %v579
        %v1020 = vpop.f32.mrf.mxu0
        %v1021 = vadd.f32 %v869, %v1020
        %1022 = vmatmul.f32.gmra.mxu0 %v587
        %v1023 = vpop.f32.mrf.mxu0
        %v1024 = vadd.f32 %v869, %v1023
        %1025 = vmatmul.f32.gmra.mxu0 %v595
        %v1026 = vpop.f32.mrf.mxu0
        %v1027 = vadd.f32 %v869, %v1026
        %1028 = vmatmul.f32.gmra.mxu0 %v603
        %v1029 = vpop.f32.mrf.mxu0
        %v1030 = vadd.f32 %v869, %v1029
        %1031 = vmatmul.f32.gmra.mxu0 %v611
        %v1032 = vpop.f32.mrf.mxu0
        %v1033 = vadd.f32 %v869, %v1032
        %1034 = vmatmul.f32.gmra.mxu0 %v619
        %v1035 = vpop.f32.mrf.mxu0
        %v1036 = vadd.f32 %v869, %v1035
        %1037 = vmatmul.f32.gmra.mxu0 %v627
        %v1038 = vpop.f32.mrf.mxu0
        %v1039 = vadd.f32 %v869, %v1038
        %1040 = vmatmul.f32.gmra.mxu0 %v635
        %v1041 = vpop.f32.mrf.mxu0
        %v1042 = vadd.f32 %v869, %v1041
        %1043 = vmatmul.f32.gmra.mxu0 %v643
        %v1044 = vpop.f32.mrf.mxu0
        %v1045 = vadd.f32 %v869, %v1044
        %1046 = vmatmul.f32.gmra.mxu0 %v651
        %v1047 = vpop.f32.mrf.mxu0
        %v1048 = vadd.f32 %v869, %v1047
        %1049 = vmatmul.f32.gmra.mxu0 %v659
        %v1050 = vpop.f32.mrf.mxu0
        %v1051 = vadd.f32 %v869, %v1050
        %1052 = vmatmul.f32.gmra.mxu0 %v667
        %v1053 = vpop.f32.mrf.mxu0
        %v1054 = vadd.f32 %v869, %v1053
        %1055 = vmatmul.f32.gmra.mxu0 %v675
        %v1056 = vpop.f32.mrf.mxu0
        %v1057 = vadd.f32 %v869, %v1056
        %1058 = vmatmul.f32.gmra.mxu0 %v683
        %v1059 = vpop.f32.mrf.mxu0
        %v1060 = vadd.f32 %v869, %v1059
        %1061 = vmatmul.f32.gmra.mxu0 %v691
        %v1062 = vpop.f32.mrf.mxu0
        %v1063 = vadd.f32 %v869, %v1062
        %1064 = vmatmul.f32.gmra.mxu0 %v699
        %v1065 = vpop.f32.mrf.mxu0
        %v1066 = vadd.f32 %v869, %v1065
        %1067 = vmatmul.f32.gmra.mxu0 %v707
        %v1068 = vpop.f32.mrf.mxu0
        %v1069 = vadd.f32 %v869, %v1068
        %1070 = vmatmul.f32.gmra.mxu0 %v715
        %v1071 = vpop.f32.mrf.mxu0
        %v1072 = vadd.f32 %v869, %v1071
        %1073 = vmatmul.f32.gmra.mxu0 %v723
        %v1074 = vpop.f32.mrf.mxu0
        %v1075 = vadd.f32 %v869, %v1074
        %1076 = vmatmul.f32.gmra.mxu0 %v731
        %v1077 = vpop.f32.mrf.mxu0
        %v1078 = vadd.f32 %v869, %v1077
        %1079 = vdwg.mxu0
        %1080 = vmatpush.msra.mxu0 %v770
        %1081 = vmatpush.msra.mxu0 %v769
        %1082 = vmatpush.msra.mxu0 %v768
        %1083 = vmatpush.msra.mxu0 %v767
        %1084 = vmatpush.msra.mxu0 %v766
        %1085 = vmatpush.msra.mxu0 %v765
        %1086 = vmatpush.msra.mxu0 %v764
        %1087 = vmatpush.msra.mxu0 %v763
        %1088 = vmatpush.msra.mxu0 %v762
        %1089 = vmatpush.msra.mxu0 %v761
        %1090 = vmatpush.msra.mxu0 %v760
        %1091 = vmatpush.msra.mxu0 %v759
        %1092 = vmatpush.msra.mxu0 %v758
        %1093 = vmatpush.msra.mxu0 %v757
        %1094 = vmatpush.msra.mxu0 %v756
        %1095 = vmatpush.msra.mxu0 %v755
        %1096 = vmatmul.f32.gmra.mxu0 %v228
        %v1097 = vpop.f32.mrf.mxu0
        %v1098 = vadd.f32 %v889, %v1097
        %1099 = vmatmul.f32.gmra.mxu0 %v236
        %v1100 = vpop.f32.mrf.mxu0
        %v1101 = vadd.f32 %v892, %v1100
        %1102 = vmatmul.f32.gmra.mxu0 %v244
        %v1103 = vpop.f32.mrf.mxu0
        %v1104 = vadd.f32 %v895, %v1103
        %1105 = vmatmul.f32.gmra.mxu0 %v252
        %v1106 = vpop.f32.mrf.mxu0
        %v1107 = vadd.f32 %v898, %v1106
        %1108 = vmatmul.f32.gmra.mxu0 %v260
        %v1109 = vpop.f32.mrf.mxu0
        %v1110 = vadd.f32 %v901, %v1109
        %1111 = vmatmul.f32.gmra.mxu0 %v268
        %v1112 = vpop.f32.mrf.mxu0
        %v1113 = vadd.f32 %v904, %v1112
        %1114 = vmatmul.f32.gmra.mxu0 %v276
        %v1115 = vpop.f32.mrf.mxu0
        %v1116 = vadd.f32 %v907, %v1115
        %1117 = vmatmul.f32.gmra.mxu0 %v284
        %v1118 = vpop.f32.mrf.mxu0
        %v1119 = vadd.f32 %v910, %v1118
        %1120 = vmatmul.f32.gmra.mxu0 %v292
        %v1121 = vpop.f32.mrf.mxu0
        %v1122 = vadd.f32 %v913, %v1121
        %1123 = vmatmul.f32.gmra.mxu0 %v300
        %v1124 = vpop.f32.mrf.mxu0
        %v1125 = vadd.f32 %v916, %v1124
        %1126 = vmatmul.f32.gmra.mxu0 %v308
        %v1127 = vpop.f32.mrf.mxu0
        %v1128 = vadd.f32 %v919, %v1127
        %1129 = vmatmul.f32.gmra.mxu0 %v316
        %v1130 = vpop.f32.mrf.mxu0
        %v1131 = vadd.f32 %v922, %v1130
        %1132 = vmatmul.f32.gmra.mxu0 %v324
        %v1133 = vpop.f32.mrf.mxu0
        %v1134 = vadd.f32 %v925, %v1133
        %1135 = vmatmul.f32.gmra.mxu0 %v332
        %v1136 = vpop.f32.mrf.mxu0
        %v1137 = vadd.f32 %v928, %v1136
        %1138 = vmatmul.f32.gmra.mxu0 %v340
        %v1139 = vpop.f32.mrf.mxu0
        %v1140 = vadd.f32 %v931, %v1139
        %1141 = vmatmul.f32.gmra.mxu0 %v348
        %v1142 = vpop.f32.mrf.mxu0
        %v1143 = vadd.f32 %v934, %v1142
        %1144 = vmatmul.f32.gmra.mxu0 %v356
        %v1145 = vpop.f32.mrf.mxu0
        %v1146 = vadd.f32 %v937, %v1145
        %1147 = vmatmul.f32.gmra.mxu0 %v364
        %v1148 = vpop.f32.mrf.mxu0
        %v1149 = vadd.f32 %v940, %v1148
        %1150 = vmatmul.f32.gmra.mxu0 %v372
        %v1151 = vpop.f32.mrf.mxu0
        %v1152 = vadd.f32 %v943, %v1151
        %1153 = vmatmul.f32.gmra.mxu0 %v380
        %v1154 = vpop.f32.mrf.mxu0
        %v1155 = vadd.f32 %v946, %v1154
        %1156 = vmatmul.f32.gmra.mxu0 %v388
        %v1157 = vpop.f32.mrf.mxu0
        %v1158 = vadd.f32 %v949, %v1157
        %1159 = vmatmul.f32.gmra.mxu0 %v396
        %v1160 = vpop.f32.mrf.mxu0
        %v1161 = vadd.f32 %v952, %v1160
        %1162 = vmatmul.f32.gmra.mxu0 %v404
        %v1163 = vpop.f32.mrf.mxu0
        %v1164 = vadd.f32 %v955, %v1163
        %1165 = vmatmul.f32.gmra.mxu0 %v412
        %v1166 = vpop.f32.mrf.mxu0
        %v1167 = vadd.f32 %v958, %v1166
        %1168 = vmatmul.f32.gmra.mxu0 %v420
        %v1169 = vpop.f32.mrf.mxu0
        %v1170 = vadd.f32 %v961, %v1169
        %1171 = vmatmul.f32.gmra.mxu0 %v428
        %v1172 = vpop.f32.mrf.mxu0
        %v1173 = vadd.f32 %v964, %v1172
        %1174 = vmatmul.f32.gmra.mxu0 %v436
        %v1175 = vpop.f32.mrf.mxu0
        %v1176 = vadd.f32 %v967, %v1175
        %1177 = vmatmul.f32.gmra.mxu0 %v444
        %v1178 = vpop.f32.mrf.mxu0
        %v1179 = vadd.f32 %v970, %v1178
        %1180 = vmatmul.f32.gmra.mxu0 %v452
        %v1181 = vpop.f32.mrf.mxu0
        %v1182 = vadd.f32 %v973, %v1181
        %1183 = vmatmul.f32.gmra.mxu0 %v460
        %v1184 = vpop.f32.mrf.mxu0
        %v1185 = vadd.f32 %v976, %v1184
        %1186 = vmatmul.f32.gmra.mxu0 %v468
        %v1187 = vpop.f32.mrf.mxu0
        %v1188 = vadd.f32 %v979, %v1187
        %1189 = vmatmul.f32.gmra.mxu0 %v476
        %v1190 = vpop.f32.mrf.mxu0
        %v1191 = vadd.f32 %v982, %v1190
        %1192 = vmatmul.f32.gmra.mxu0 %v484
        %v1193 = vpop.f32.mrf.mxu0
        %v1194 = vadd.f32 %v985, %v1193
        %1195 = vmatmul.f32.gmra.mxu0 %v492
        %v1196 = vpop.f32.mrf.mxu0
        %v1197 = vadd.f32 %v988, %v1196
        %1198 = vmatmul.f32.gmra.mxu0 %v500
        %v1199 = vpop.f32.mrf.mxu0
        %v1200 = vadd.f32 %v991, %v1199
        %1201 = vmatmul.f32.gmra.mxu0 %v508
        %v1202 = vpop.f32.mrf.mxu0
        %v1203 = vadd.f32 %v994, %v1202
        %1204 = vmatmul.f32.gmra.mxu0 %v516
        %v1205 = vpop.f32.mrf.mxu0
        %v1206 = vadd.f32 %v997, %v1205
        %1207 = vmatmul.f32.gmra.mxu0 %v524
        %v1208 = vpop.f32.mrf.mxu0
        %v1209 = vadd.f32 %v1000, %v1208
        %1210 = vmatmul.f32.gmra.mxu0 %v532
        %v1211 = vpop.f32.mrf.mxu0
        %v1212 = vadd.f32 %v1003, %v1211
        %1213 = vmatmul.f32.gmra.mxu0 %v540
        %v1214 = vpop.f32.mrf.mxu0
        %v1215 = vadd.f32 %v1006, %v1214
        %1216 = vmatmul.f32.gmra.mxu0 %v548
        %v1217 = vpop.f32.mrf.mxu0
        %v1218 = vadd.f32 %v1009, %v1217
        %1219 = vmatmul.f32.gmra.mxu0 %v556
        %v1220 = vpop.f32.mrf.mxu0
        %v1221 = vadd.f32 %v1012, %v1220
        %1222 = vmatmul.f32.gmra.mxu0 %v564
        %v1223 = vpop.f32.mrf.mxu0
        %v1224 = vadd.f32 %v1015, %v1223
        %1225 = vmatmul.f32.gmra.mxu0 %v572
        %v1226 = vpop.f32.mrf.mxu0
        %v1227 = vadd.f32 %v1018, %v1226
        %1228 = vmatmul.f32.gmra.mxu0 %v580
        %v1229 = vpop.f32.mrf.mxu0
        %v1230 = vadd.f32 %v1021, %v1229
        %1231 = vmatmul.f32.gmra.mxu0 %v588
        %v1232 = vpop.f32.mrf.mxu0
        %v1233 = vadd.f32 %v1024, %v1232
        %1234 = vmatmul.f32.gmra.mxu0 %v596
        %v1235 = vpop.f32.mrf.mxu0
        %v1236 = vadd.f32 %v1027, %v1235
        %1237 = vmatmul.f32.gmra.mxu0 %v604
        %v1238 = vpop.f32.mrf.mxu0
        %v1239 = vadd.f32 %v1030, %v1238
        %1240 = vmatmul.f32.gmra.mxu0 %v612
        %v1241 = vpop.f32.mrf.mxu0
        %v1242 = vadd.f32 %v1033, %v1241
        %1243 = vmatmul.f32.gmra.mxu0 %v620
        %v1244 = vpop.f32.mrf.mxu0
        %v1245 = vadd.f32 %v1036, %v1244
        %1246 = vmatmul.f32.gmra.mxu0 %v628
        %v1247 = vpop.f32.mrf.mxu0
        %v1248 = vadd.f32 %v1039, %v1247
        %1249 = vmatmul.f32.gmra.mxu0 %v636
        %v1250 = vpop.f32.mrf.mxu0
        %v1251 = vadd.f32 %v1042, %v1250
        %1252 = vmatmul.f32.gmra.mxu0 %v644
        %v1253 = vpop.f32.mrf.mxu0
        %v1254 = vadd.f32 %v1045, %v1253
        %1255 = vmatmul.f32.gmra.mxu0 %v652
        %v1256 = vpop.f32.mrf.mxu0
        %v1257 = vadd.f32 %v1048, %v1256
        %1258 = vmatmul.f32.gmra.mxu0 %v660
        %v1259 = vpop.f32.mrf.mxu0
        %v1260 = vadd.f32 %v1051, %v1259
        %1261 = vmatmul.f32.gmra.mxu0 %v668
        %v1262 = vpop.f32.mrf.mxu0
        %v1263 = vadd.f32 %v1054, %v1262
        %1264 = vmatmul.f32.gmra.mxu0 %v676
        %v1265 = vpop.f32.mrf.mxu0
        %v1266 = vadd.f32 %v1057, %v1265
        %1267 = vmatmul.f32.gmra.mxu0 %v684
        %v1268 = vpop.f32.mrf.mxu0
        %v1269 = vadd.f32 %v1060, %v1268
        %1270 = vmatmul.f32.gmra.mxu0 %v692
        %v1271 = vpop.f32.mrf.mxu0
        %v1272 = vadd.f32 %v1063, %v1271
        %1273 = vmatmul.f32.gmra.mxu0 %v700
        %v1274 = vpop.f32.mrf.mxu0
        %v1275 = vadd.f32 %v1066, %v1274
        %1276 = vmatmul.f32.gmra.mxu0 %v708
        %v1277 = vpop.f32.mrf.mxu0
        %v1278 = vadd.f32 %v1069, %v1277
        %1279 = vmatmul.f32.gmra.mxu0 %v716
        %v1280 = vpop.f32.mrf.mxu0
        %v1281 = vadd.f32 %v1072, %v1280
        %1282 = vmatmul.f32.gmra.mxu0 %v724
        %v1283 = vpop.f32.mrf.mxu0
        %v1284 = vadd.f32 %v1075, %v1283
        %1285 = vmatmul.f32.gmra.mxu0 %v732
        %v1286 = vpop.f32.mrf.mxu0
        %v1287 = vadd.f32 %v1078, %v1286
        %1288 = vdwg.mxu0
        %1289 = vmatpush.msra.mxu0 %v786
        %1290 = vmatpush.msra.mxu0 %v785
        %1291 = vmatpush.msra.mxu0 %v784
        %1292 = vmatpush.msra.mxu0 %v783
        %1293 = vmatpush.msra.mxu0 %v782
        %1294 = vmatpush.msra.mxu0 %v781
        %1295 = vmatpush.msra.mxu0 %v780
        %1296 = vmatpush.msra.mxu0 %v779
        %1297 = vmatpush.msra.mxu0 %v778
        %1298 = vmatpush.msra.mxu0 %v777
        %1299 = vmatpush.msra.mxu0 %v776
        %1300 = vmatpush.msra.mxu0 %v775
        %1301 = vmatpush.msra.mxu0 %v774
        %1302 = vmatpush.msra.mxu0 %v773
        %1303 = vmatpush.msra.mxu0 %v772
        %1304 = vmatpush.msra.mxu0 %v771
        %1305 = vmatmul.f32.gmra.mxu0 %v229
        %v1306 = vpop.f32.mrf.mxu0
        %v1307 = vadd.f32 %v1098, %v1306
        %1308 = vmatmul.f32.gmra.mxu0 %v237
        %v1309 = vpop.f32.mrf.mxu0
        %v1310 = vadd.f32 %v1101, %v1309
        %1311 = vmatmul.f32.gmra.mxu0 %v245
        %v1312 = vpop.f32.mrf.mxu0
        %v1313 = vadd.f32 %v1104, %v1312
        %1314 = vmatmul.f32.gmra.mxu0 %v253
        %v1315 = vpop.f32.mrf.mxu0
        %v1316 = vadd.f32 %v1107, %v1315
        %1317 = vmatmul.f32.gmra.mxu0 %v261
        %v1318 = vpop.f32.mrf.mxu0
        %v1319 = vadd.f32 %v1110, %v1318
        %1320 = vmatmul.f32.gmra.mxu0 %v269
        %v1321 = vpop.f32.mrf.mxu0
        %v1322 = vadd.f32 %v1113, %v1321
        %1323 = vmatmul.f32.gmra.mxu0 %v277
        %v1324 = vpop.f32.mrf.mxu0
        %v1325 = vadd.f32 %v1116, %v1324
        %1326 = vmatmul.f32.gmra.mxu0 %v285
        %v1327 = vpop.f32.mrf.mxu0
        %v1328 = vadd.f32 %v1119, %v1327
        %1329 = vmatmul.f32.gmra.mxu0 %v293
        %v1330 = vpop.f32.mrf.mxu0
        %v1331 = vadd.f32 %v1122, %v1330
        %1332 = vmatmul.f32.gmra.mxu0 %v301
        %v1333 = vpop.f32.mrf.mxu0
        %v1334 = vadd.f32 %v1125, %v1333
        %1335 = vmatmul.f32.gmra.mxu0 %v309
        %v1336 = vpop.f32.mrf.mxu0
        %v1337 = vadd.f32 %v1128, %v1336
        %1338 = vmatmul.f32.gmra.mxu0 %v317
        %v1339 = vpop.f32.mrf.mxu0
        %v1340 = vadd.f32 %v1131, %v1339
        %1341 = vmatmul.f32.gmra.mxu0 %v325
        %v1342 = vpop.f32.mrf.mxu0
        %v1343 = vadd.f32 %v1134, %v1342
        %1344 = vmatmul.f32.gmra.mxu0 %v333
        %v1345 = vpop.f32.mrf.mxu0
        %v1346 = vadd.f32 %v1137, %v1345
        %1347 = vmatmul.f32.gmra.mxu0 %v341
        %v1348 = vpop.f32.mrf.mxu0
        %v1349 = vadd.f32 %v1140, %v1348
        %1350 = vmatmul.f32.gmra.mxu0 %v349
        %v1351 = vpop.f32.mrf.mxu0
        %v1352 = vadd.f32 %v1143, %v1351
        %1353 = vmatmul.f32.gmra.mxu0 %v357
        %v1354 = vpop.f32.mrf.mxu0
        %v1355 = vadd.f32 %v1146, %v1354
        %1356 = vmatmul.f32.gmra.mxu0 %v365
        %v1357 = vpop.f32.mrf.mxu0
        %v1358 = vadd.f32 %v1149, %v1357
        %1359 = vmatmul.f32.gmra.mxu0 %v373
        %v1360 = vpop.f32.mrf.mxu0
        %v1361 = vadd.f32 %v1152, %v1360
        %1362 = vmatmul.f32.gmra.mxu0 %v381
        %v1363 = vpop.f32.mrf.mxu0
        %v1364 = vadd.f32 %v1155, %v1363
        %1365 = vmatmul.f32.gmra.mxu0 %v389
        %v1366 = vpop.f32.mrf.mxu0
        %v1367 = vadd.f32 %v1158, %v1366
        %1368 = vmatmul.f32.gmra.mxu0 %v397
        %v1369 = vpop.f32.mrf.mxu0
        %v1370 = vadd.f32 %v1161, %v1369
        %1371 = vmatmul.f32.gmra.mxu0 %v405
        %v1372 = vpop.f32.mrf.mxu0
        %v1373 = vadd.f32 %v1164, %v1372
        %1374 = vmatmul.f32.gmra.mxu0 %v413
        %v1375 = vpop.f32.mrf.mxu0
        %v1376 = vadd.f32 %v1167, %v1375
        %1377 = vmatmul.f32.gmra.mxu0 %v421
        %v1378 = vpop.f32.mrf.mxu0
        %v1379 = vadd.f32 %v1170, %v1378
        %1380 = vmatmul.f32.gmra.mxu0 %v429
        %v1381 = vpop.f32.mrf.mxu0
        %v1382 = vadd.f32 %v1173, %v1381
        %1383 = vmatmul.f32.gmra.mxu0 %v437
        %v1384 = vpop.f32.mrf.mxu0
        %v1385 = vadd.f32 %v1176, %v1384
        %1386 = vmatmul.f32.gmra.mxu0 %v445
        %v1387 = vpop.f32.mrf.mxu0
        %v1388 = vadd.f32 %v1179, %v1387
        %1389 = vmatmul.f32.gmra.mxu0 %v453
        %v1390 = vpop.f32.mrf.mxu0
        %v1391 = vadd.f32 %v1182, %v1390
        %1392 = vmatmul.f32.gmra.mxu0 %v461
        %v1393 = vpop.f32.mrf.mxu0
        %v1394 = vadd.f32 %v1185, %v1393
        %1395 = vmatmul.f32.gmra.mxu0 %v469
        %v1396 = vpop.f32.mrf.mxu0
        %v1397 = vadd.f32 %v1188, %v1396
        %1398 = vmatmul.f32.gmra.mxu0 %v477
        %v1399 = vpop.f32.mrf.mxu0
        %v1400 = vadd.f32 %v1191, %v1399
        %1401 = vmatmul.f32.gmra.mxu0 %v485
        %v1402 = vpop.f32.mrf.mxu0
        %v1403 = vadd.f32 %v1194, %v1402
        %1404 = vmatmul.f32.gmra.mxu0 %v493
        %v1405 = vpop.f32.mrf.mxu0
        %v1406 = vadd.f32 %v1197, %v1405
        %1407 = vmatmul.f32.gmra.mxu0 %v501
        %v1408 = vpop.f32.mrf.mxu0
        %v1409 = vadd.f32 %v1200, %v1408
        %1410 = vmatmul.f32.gmra.mxu0 %v509
        %v1411 = vpop.f32.mrf.mxu0
        %v1412 = vadd.f32 %v1203, %v1411
        %1413 = vmatmul.f32.gmra.mxu0 %v517
        %v1414 = vpop.f32.mrf.mxu0
        %v1415 = vadd.f32 %v1206, %v1414
        %1416 = vmatmul.f32.gmra.mxu0 %v525
        %v1417 = vpop.f32.mrf.mxu0
        %v1418 = vadd.f32 %v1209, %v1417
        %1419 = vmatmul.f32.gmra.mxu0 %v533
        %v1420 = vpop.f32.mrf.mxu0
        %v1421 = vadd.f32 %v1212, %v1420
        %1422 = vmatmul.f32.gmra.mxu0 %v541
        %v1423 = vpop.f32.mrf.mxu0
        %v1424 = vadd.f32 %v1215, %v1423
        %1425 = vmatmul.f32.gmra.mxu0 %v549
        %v1426 = vpop.f32.mrf.mxu0
        %v1427 = vadd.f32 %v1218, %v1426
        %1428 = vmatmul.f32.gmra.mxu0 %v557
        %v1429 = vpop.f32.mrf.mxu0
        %v1430 = vadd.f32 %v1221, %v1429
        %1431 = vmatmul.f32.gmra.mxu0 %v565
        %v1432 = vpop.f32.mrf.mxu0
        %v1433 = vadd.f32 %v1224, %v1432
        %1434 = vmatmul.f32.gmra.mxu0 %v573
        %v1435 = vpop.f32.mrf.mxu0
        %v1436 = vadd.f32 %v1227, %v1435
        %1437 = vmatmul.f32.gmra.mxu0 %v581
        %v1438 = vpop.f32.mrf.mxu0
        %v1439 = vadd.f32 %v1230, %v1438
        %1440 = vmatmul.f32.gmra.mxu0 %v589
        %v1441 = vpop.f32.mrf.mxu0
        %v1442 = vadd.f32 %v1233, %v1441
        %1443 = vmatmul.f32.gmra.mxu0 %v597
        %v1444 = vpop.f32.mrf.mxu0
        %v1445 = vadd.f32 %v1236, %v1444
        %1446 = vmatmul.f32.gmra.mxu0 %v605
        %v1447 = vpop.f32.mrf.mxu0
        %v1448 = vadd.f32 %v1239, %v1447
        %1449 = vmatmul.f32.gmra.mxu0 %v613
        %v1450 = vpop.f32.mrf.mxu0
        %v1451 = vadd.f32 %v1242, %v1450
        %1452 = vmatmul.f32.gmra.mxu0 %v621
        %v1453 = vpop.f32.mrf.mxu0
        %v1454 = vadd.f32 %v1245, %v1453
        %1455 = vmatmul.f32.gmra.mxu0 %v629
        %v1456 = vpop.f32.mrf.mxu0
        %v1457 = vadd.f32 %v1248, %v1456
        %1458 = vmatmul.f32.gmra.mxu0 %v637
        %v1459 = vpop.f32.mrf.mxu0
        %v1460 = vadd.f32 %v1251, %v1459
        %1461 = vmatmul.f32.gmra.mxu0 %v645
        %v1462 = vpop.f32.mrf.mxu0
        %v1463 = vadd.f32 %v1254, %v1462
        %1464 = vmatmul.f32.gmra.mxu0 %v653
        %v1465 = vpop.f32.mrf.mxu0
        %v1466 = vadd.f32 %v1257, %v1465
        %1467 = vmatmul.f32.gmra.mxu0 %v661
        %v1468 = vpop.f32.mrf.mxu0
        %v1469 = vadd.f32 %v1260, %v1468
        %1470 = vmatmul.f32.gmra.mxu0 %v669
        %v1471 = vpop.f32.mrf.mxu0
        %v1472 = vadd.f32 %v1263, %v1471
        %1473 = vmatmul.f32.gmra.mxu0 %v677
        %v1474 = vpop.f32.mrf.mxu0
        %v1475 = vadd.f32 %v1266, %v1474
        %1476 = vmatmul.f32.gmra.mxu0 %v685
        %v1477 = vpop.f32.mrf.mxu0
        %v1478 = vadd.f32 %v1269, %v1477
        %1479 = vmatmul.f32.gmra.mxu0 %v693
        %v1480 = vpop.f32.mrf.mxu0
        %v1481 = vadd.f32 %v1272, %v1480
        %1482 = vmatmul.f32.gmra.mxu0 %v701
        %v1483 = vpop.f32.mrf.mxu0
        %v1484 = vadd.f32 %v1275, %v1483
        %1485 = vmatmul.f32.gmra.mxu0 %v709
        %v1486 = vpop.f32.mrf.mxu0
        %v1487 = vadd.f32 %v1278, %v1486
        %1488 = vmatmul.f32.gmra.mxu0 %v717
        %v1489 = vpop.f32.mrf.mxu0
        %v1490 = vadd.f32 %v1281, %v1489
        %1491 = vmatmul.f32.gmra.mxu0 %v725
        %v1492 = vpop.f32.mrf.mxu0
        %v1493 = vadd.f32 %v1284, %v1492
        %1494 = vmatmul.f32.gmra.mxu0 %v733
        %v1495 = vpop.f32.mrf.mxu0
        %v1496 = vadd.f32 %v1287, %v1495
        %1497 = vdwg.mxu0
        %1498 = vmatpush.msra.mxu0 %v802
        %1499 = vmatpush.msra.mxu0 %v801
        %1500 = vmatpush.msra.mxu0 %v800
        %1501 = vmatpush.msra.mxu0 %v799
        %1502 = vmatpush.msra.mxu0 %v798
        %1503 = vmatpush.msra.mxu0 %v797
        %1504 = vmatpush.msra.mxu0 %v796
        %1505 = vmatpush.msra.mxu0 %v795
        %1506 = vmatpush.msra.mxu0 %v794
        %1507 = vmatpush.msra.mxu0 %v793
        %1508 = vmatpush.msra.mxu0 %v792
        %1509 = vmatpush.msra.mxu0 %v791
        %1510 = vmatpush.msra.mxu0 %v790
        %1511 = vmatpush.msra.mxu0 %v789
        %1512 = vmatpush.msra.mxu0 %v788
        %1513 = vmatpush.msra.mxu0 %v787
        %1514 = vmatmul.f32.gmra.mxu0 %v230
        %v1515 = vpop.f32.mrf.mxu0
        %v1516 = vadd.f32 %v1307, %v1515
        %1517 = vmatmul.f32.gmra.mxu0 %v238
        %v1518 = vpop.f32.mrf.mxu0
        %v1519 = vadd.f32 %v1310, %v1518
        %1520 = vmatmul.f32.gmra.mxu0 %v246
        %v1521 = vpop.f32.mrf.mxu0
        %v1522 = vadd.f32 %v1313, %v1521
        %1523 = vmatmul.f32.gmra.mxu0 %v254
        %v1524 = vpop.f32.mrf.mxu0
        %v1525 = vadd.f32 %v1316, %v1524
        %1526 = vmatmul.f32.gmra.mxu0 %v262
        %v1527 = vpop.f32.mrf.mxu0
        %v1528 = vadd.f32 %v1319, %v1527
        %1529 = vmatmul.f32.gmra.mxu0 %v270
        %v1530 = vpop.f32.mrf.mxu0
        %v1531 = vadd.f32 %v1322, %v1530
        %1532 = vmatmul.f32.gmra.mxu0 %v278
        %v1533 = vpop.f32.mrf.mxu0
        %v1534 = vadd.f32 %v1325, %v1533
        %1535 = vmatmul.f32.gmra.mxu0 %v286
        %v1536 = vpop.f32.mrf.mxu0
        %v1537 = vadd.f32 %v1328, %v1536
        %1538 = vmatmul.f32.gmra.mxu0 %v294
        %v1539 = vpop.f32.mrf.mxu0
        %v1540 = vadd.f32 %v1331, %v1539
        %1541 = vmatmul.f32.gmra.mxu0 %v302
        %v1542 = vpop.f32.mrf.mxu0
        %v1543 = vadd.f32 %v1334, %v1542
        %1544 = vmatmul.f32.gmra.mxu0 %v310
        %v1545 = vpop.f32.mrf.mxu0
        %v1546 = vadd.f32 %v1337, %v1545
        %1547 = vmatmul.f32.gmra.mxu0 %v318
        %v1548 = vpop.f32.mrf.mxu0
        %v1549 = vadd.f32 %v1340, %v1548
        %1550 = vmatmul.f32.gmra.mxu0 %v326
        %v1551 = vpop.f32.mrf.mxu0
        %v1552 = vadd.f32 %v1343, %v1551
        %1553 = vmatmul.f32.gmra.mxu0 %v334
        %v1554 = vpop.f32.mrf.mxu0
        %v1555 = vadd.f32 %v1346, %v1554
        %1556 = vmatmul.f32.gmra.mxu0 %v342
        %v1557 = vpop.f32.mrf.mxu0
        %v1558 = vadd.f32 %v1349, %v1557
        %1559 = vmatmul.f32.gmra.mxu0 %v350
        %v1560 = vpop.f32.mrf.mxu0
        %v1561 = vadd.f32 %v1352, %v1560
        %1562 = vmatmul.f32.gmra.mxu0 %v358
        %v1563 = vpop.f32.mrf.mxu0
        %v1564 = vadd.f32 %v1355, %v1563
        %1565 = vmatmul.f32.gmra.mxu0 %v366
        %v1566 = vpop.f32.mrf.mxu0
        %v1567 = vadd.f32 %v1358, %v1566
        %1568 = vmatmul.f32.gmra.mxu0 %v374
        %v1569 = vpop.f32.mrf.mxu0
        %v1570 = vadd.f32 %v1361, %v1569
        %1571 = vmatmul.f32.gmra.mxu0 %v382
        %v1572 = vpop.f32.mrf.mxu0
        %v1573 = vadd.f32 %v1364, %v1572
        %1574 = vmatmul.f32.gmra.mxu0 %v390
        %v1575 = vpop.f32.mrf.mxu0
        %v1576 = vadd.f32 %v1367, %v1575
        %1577 = vmatmul.f32.gmra.mxu0 %v398
        %v1578 = vpop.f32.mrf.mxu0
        %v1579 = vadd.f32 %v1370, %v1578
        %1580 = vmatmul.f32.gmra.mxu0 %v406
        %v1581 = vpop.f32.mrf.mxu0
        %v1582 = vadd.f32 %v1373, %v1581
        %1583 = vmatmul.f32.gmra.mxu0 %v414
        %v1584 = vpop.f32.mrf.mxu0
        %v1585 = vadd.f32 %v1376, %v1584
        %1586 = vmatmul.f32.gmra.mxu0 %v422
        %v1587 = vpop.f32.mrf.mxu0
        %v1588 = vadd.f32 %v1379, %v1587
        %1589 = vmatmul.f32.gmra.mxu0 %v430
        %v1590 = vpop.f32.mrf.mxu0
        %v1591 = vadd.f32 %v1382, %v1590
        %1592 = vmatmul.f32.gmra.mxu0 %v438
        %v1593 = vpop.f32.mrf.mxu0
        %v1594 = vadd.f32 %v1385, %v1593
        %1595 = vmatmul.f32.gmra.mxu0 %v446
        %v1596 = vpop.f32.mrf.mxu0
        %v1597 = vadd.f32 %v1388, %v1596
        %1598 = vmatmul.f32.gmra.mxu0 %v454
        %v1599 = vpop.f32.mrf.mxu0
        %v1600 = vadd.f32 %v1391, %v1599
        %1601 = vmatmul.f32.gmra.mxu0 %v462
        %v1602 = vpop.f32.mrf.mxu0
        %v1603 = vadd.f32 %v1394, %v1602
        %1604 = vmatmul.f32.gmra.mxu0 %v470
        %v1605 = vpop.f32.mrf.mxu0
        %v1606 = vadd.f32 %v1397, %v1605
        %1607 = vmatmul.f32.gmra.mxu0 %v478
        %v1608 = vpop.f32.mrf.mxu0
        %v1609 = vadd.f32 %v1400, %v1608
        %1610 = vmatmul.f32.gmra.mxu0 %v486
        %v1611 = vpop.f32.mrf.mxu0
        %v1612 = vadd.f32 %v1403, %v1611
        %1613 = vmatmul.f32.gmra.mxu0 %v494
        %v1614 = vpop.f32.mrf.mxu0
        %v1615 = vadd.f32 %v1406, %v1614
        %1616 = vmatmul.f32.gmra.mxu0 %v502
        %v1617 = vpop.f32.mrf.mxu0
        %v1618 = vadd.f32 %v1409, %v1617
        %1619 = vmatmul.f32.gmra.mxu0 %v510
        %v1620 = vpop.f32.mrf.mxu0
        %v1621 = vadd.f32 %v1412, %v1620
        %1622 = vmatmul.f32.gmra.mxu0 %v518
        %v1623 = vpop.f32.mrf.mxu0
        %v1624 = vadd.f32 %v1415, %v1623
        %1625 = vmatmul.f32.gmra.mxu0 %v526
        %v1626 = vpop.f32.mrf.mxu0
        %v1627 = vadd.f32 %v1418, %v1626
        %1628 = vmatmul.f32.gmra.mxu0 %v534
        %v1629 = vpop.f32.mrf.mxu0
        %v1630 = vadd.f32 %v1421, %v1629
        %1631 = vmatmul.f32.gmra.mxu0 %v542
        %v1632 = vpop.f32.mrf.mxu0
        %v1633 = vadd.f32 %v1424, %v1632
        %1634 = vmatmul.f32.gmra.mxu0 %v550
        %v1635 = vpop.f32.mrf.mxu0
        %v1636 = vadd.f32 %v1427, %v1635
        %1637 = vmatmul.f32.gmra.mxu0 %v558
        %v1638 = vpop.f32.mrf.mxu0
        %v1639 = vadd.f32 %v1430, %v1638
        %1640 = vmatmul.f32.gmra.mxu0 %v566
        %v1641 = vpop.f32.mrf.mxu0
        %v1642 = vadd.f32 %v1433, %v1641
        %1643 = vmatmul.f32.gmra.mxu0 %v574
        %v1644 = vpop.f32.mrf.mxu0
        %v1645 = vadd.f32 %v1436, %v1644
        %1646 = vmatmul.f32.gmra.mxu0 %v582
        %v1647 = vpop.f32.mrf.mxu0
        %v1648 = vadd.f32 %v1439, %v1647
        %1649 = vmatmul.f32.gmra.mxu0 %v590
        %v1650 = vpop.f32.mrf.mxu0
        %v1651 = vadd.f32 %v1442, %v1650
        %1652 = vmatmul.f32.gmra.mxu0 %v598
        %v1653 = vpop.f32.mrf.mxu0
        %v1654 = vadd.f32 %v1445, %v1653
        %1655 = vmatmul.f32.gmra.mxu0 %v606
        %v1656 = vpop.f32.mrf.mxu0
        %v1657 = vadd.f32 %v1448, %v1656
        %1658 = vmatmul.f32.gmra.mxu0 %v614
        %v1659 = vpop.f32.mrf.mxu0
        %v1660 = vadd.f32 %v1451, %v1659
        %1661 = vmatmul.f32.gmra.mxu0 %v622
        %v1662 = vpop.f32.mrf.mxu0
        %v1663 = vadd.f32 %v1454, %v1662
        %1664 = vmatmul.f32.gmra.mxu0 %v630
        %v1665 = vpop.f32.mrf.mxu0
        %v1666 = vadd.f32 %v1457, %v1665
        %1667 = vmatmul.f32.gmra.mxu0 %v638
        %v1668 = vpop.f32.mrf.mxu0
        %v1669 = vadd.f32 %v1460, %v1668
        %1670 = vmatmul.f32.gmra.mxu0 %v646
        %v1671 = vpop.f32.mrf.mxu0
        %v1672 = vadd.f32 %v1463, %v1671
        %1673 = vmatmul.f32.gmra.mxu0 %v654
        %v1674 = vpop.f32.mrf.mxu0
        %v1675 = vadd.f32 %v1466, %v1674
        %1676 = vmatmul.f32.gmra.mxu0 %v662
        %v1677 = vpop.f32.mrf.mxu0
        %v1678 = vadd.f32 %v1469, %v1677
        %1679 = vmatmul.f32.gmra.mxu0 %v670
        %v1680 = vpop.f32.mrf.mxu0
        %v1681 = vadd.f32 %v1472, %v1680
        %1682 = vmatmul.f32.gmra.mxu0 %v678
        %v1683 = vpop.f32.mrf.mxu0
        %v1684 = vadd.f32 %v1475, %v1683
        %1685 = vmatmul.f32.gmra.mxu0 %v686
        %v1686 = vpop.f32.mrf.mxu0
        %v1687 = vadd.f32 %v1478, %v1686
        %1688 = vmatmul.f32.gmra.mxu0 %v694
        %v1689 = vpop.f32.mrf.mxu0
        %v1690 = vadd.f32 %v1481, %v1689
        %1691 = vmatmul.f32.gmra.mxu0 %v702
        %v1692 = vpop.f32.mrf.mxu0
        %v1693 = vadd.f32 %v1484, %v1692
        %1694 = vmatmul.f32.gmra.mxu0 %v710
        %v1695 = vpop.f32.mrf.mxu0
        %v1696 = vadd.f32 %v1487, %v1695
        %1697 = vmatmul.f32.gmra.mxu0 %v718
        %v1698 = vpop.f32.mrf.mxu0
        %v1699 = vadd.f32 %v1490, %v1698
        %1700 = vmatmul.f32.gmra.mxu0 %v726
        %v1701 = vpop.f32.mrf.mxu0
        %v1702 = vadd.f32 %v1493, %v1701
        %1703 = vmatmul.f32.gmra.mxu0 %v734
        %v1704 = vpop.f32.mrf.mxu0
        %v1705 = vadd.f32 %v1496, %v1704
        %1706 = vdwg.mxu0
        %1707 = vmatpush.msra.mxu0 %v818
        %1708 = vmatpush.msra.mxu0 %v817
        %1709 = vmatpush.msra.mxu0 %v816
        %1710 = vmatpush.msra.mxu0 %v815
        %1711 = vmatpush.msra.mxu0 %v814
        %1712 = vmatpush.msra.mxu0 %v813
        %1713 = vmatpush.msra.mxu0 %v812
        %1714 = vmatpush.msra.mxu0 %v811
        %1715 = vmatpush.msra.mxu0 %v810
        %1716 = vmatpush.msra.mxu0 %v809
        %1717 = vmatpush.msra.mxu0 %v808
        %1718 = vmatpush.msra.mxu0 %v807
        %1719 = vmatpush.msra.mxu0 %v806
        %1720 = vmatpush.msra.mxu0 %v805
        %1721 = vmatpush.msra.mxu0 %v804
        %1722 = vmatpush.msra.mxu0 %v803
        %1723 = vmatmul.f32.gmra.mxu0 %v231
        %v1724 = vpop.f32.mrf.mxu0
        %v1725 = vadd.f32 %v1516, %v1724
        %1726 = vmatmul.f32.gmra.mxu0 %v239
        %v1727 = vpop.f32.mrf.mxu0
        %v1728 = vadd.f32 %v1519, %v1727
        %1729 = vmatmul.f32.gmra.mxu0 %v247
        %v1730 = vpop.f32.mrf.mxu0
        %v1731 = vadd.f32 %v1522, %v1730
        %1732 = vmatmul.f32.gmra.mxu0 %v255
        %v1733 = vpop.f32.mrf.mxu0
        %v1734 = vadd.f32 %v1525, %v1733
        %1735 = vmatmul.f32.gmra.mxu0 %v263
        %v1736 = vpop.f32.mrf.mxu0
        %v1737 = vadd.f32 %v1528, %v1736
        %1738 = vmatmul.f32.gmra.mxu0 %v271
        %v1739 = vpop.f32.mrf.mxu0
        %v1740 = vadd.f32 %v1531, %v1739
        %1741 = vmatmul.f32.gmra.mxu0 %v279
        %v1742 = vpop.f32.mrf.mxu0
        %v1743 = vadd.f32 %v1534, %v1742
        %1744 = vmatmul.f32.gmra.mxu0 %v287
        %v1745 = vpop.f32.mrf.mxu0
        %v1746 = vadd.f32 %v1537, %v1745
        %1747 = vmatmul.f32.gmra.mxu0 %v295
        %v1748 = vpop.f32.mrf.mxu0
        %v1749 = vadd.f32 %v1540, %v1748
        %1750 = vmatmul.f32.gmra.mxu0 %v303
        %v1751 = vpop.f32.mrf.mxu0
        %v1752 = vadd.f32 %v1543, %v1751
        %1753 = vmatmul.f32.gmra.mxu0 %v311
        %v1754 = vpop.f32.mrf.mxu0
        %v1755 = vadd.f32 %v1546, %v1754
        %1756 = vmatmul.f32.gmra.mxu0 %v319
        %v1757 = vpop.f32.mrf.mxu0
        %v1758 = vadd.f32 %v1549, %v1757
        %1759 = vmatmul.f32.gmra.mxu0 %v327
        %v1760 = vpop.f32.mrf.mxu0
        %v1761 = vadd.f32 %v1552, %v1760
        %1762 = vmatmul.f32.gmra.mxu0 %v335
        %v1763 = vpop.f32.mrf.mxu0
        %v1764 = vadd.f32 %v1555, %v1763
        %1765 = vmatmul.f32.gmra.mxu0 %v343
        %v1766 = vpop.f32.mrf.mxu0
        %v1767 = vadd.f32 %v1558, %v1766
        %1768 = vmatmul.f32.gmra.mxu0 %v351
        %v1769 = vpop.f32.mrf.mxu0
        %v1770 = vadd.f32 %v1561, %v1769
        %1771 = vmatmul.f32.gmra.mxu0 %v359
        %v1772 = vpop.f32.mrf.mxu0
        %v1773 = vadd.f32 %v1564, %v1772
        %1774 = vmatmul.f32.gmra.mxu0 %v367
        %v1775 = vpop.f32.mrf.mxu0
        %v1776 = vadd.f32 %v1567, %v1775
        %1777 = vmatmul.f32.gmra.mxu0 %v375
        %v1778 = vpop.f32.mrf.mxu0
        %v1779 = vadd.f32 %v1570, %v1778
        %1780 = vmatmul.f32.gmra.mxu0 %v383
        %v1781 = vpop.f32.mrf.mxu0
        %v1782 = vadd.f32 %v1573, %v1781
        %1783 = vmatmul.f32.gmra.mxu0 %v391
        %v1784 = vpop.f32.mrf.mxu0
        %v1785 = vadd.f32 %v1576, %v1784
        %1786 = vmatmul.f32.gmra.mxu0 %v399
        %v1787 = vpop.f32.mrf.mxu0
        %v1788 = vadd.f32 %v1579, %v1787
        %1789 = vmatmul.f32.gmra.mxu0 %v407
        %v1790 = vpop.f32.mrf.mxu0
        %v1791 = vadd.f32 %v1582, %v1790
        %1792 = vmatmul.f32.gmra.mxu0 %v415
        %v1793 = vpop.f32.mrf.mxu0
        %v1794 = vadd.f32 %v1585, %v1793
        %1795 = vmatmul.f32.gmra.mxu0 %v423
        %v1796 = vpop.f32.mrf.mxu0
        %v1797 = vadd.f32 %v1588, %v1796
        %1798 = vmatmul.f32.gmra.mxu0 %v431
        %v1799 = vpop.f32.mrf.mxu0
        %v1800 = vadd.f32 %v1591, %v1799
        %1801 = vmatmul.f32.gmra.mxu0 %v439
        %v1802 = vpop.f32.mrf.mxu0
        %v1803 = vadd.f32 %v1594, %v1802
        %1804 = vmatmul.f32.gmra.mxu0 %v447
        %v1805 = vpop.f32.mrf.mxu0
        %v1806 = vadd.f32 %v1597, %v1805
        %1807 = vmatmul.f32.gmra.mxu0 %v455
        %v1808 = vpop.f32.mrf.mxu0
        %v1809 = vadd.f32 %v1600, %v1808
        %1810 = vmatmul.f32.gmra.mxu0 %v463
        %v1811 = vpop.f32.mrf.mxu0
        %v1812 = vadd.f32 %v1603, %v1811
        %1813 = vmatmul.f32.gmra.mxu0 %v471
        %v1814 = vpop.f32.mrf.mxu0
        %v1815 = vadd.f32 %v1606, %v1814
        %1816 = vmatmul.f32.gmra.mxu0 %v479
        %v1817 = vpop.f32.mrf.mxu0
        %v1818 = vadd.f32 %v1609, %v1817
        %1819 = vmatmul.f32.gmra.mxu0 %v487
        %v1820 = vpop.f32.mrf.mxu0
        %v1821 = vadd.f32 %v1612, %v1820
        %1822 = vmatmul.f32.gmra.mxu0 %v495
        %v1823 = vpop.f32.mrf.mxu0
        %v1824 = vadd.f32 %v1615, %v1823
        %1825 = vmatmul.f32.gmra.mxu0 %v503
        %v1826 = vpop.f32.mrf.mxu0
        %v1827 = vadd.f32 %v1618, %v1826
        %1828 = vmatmul.f32.gmra.mxu0 %v511
        %v1829 = vpop.f32.mrf.mxu0
        %v1830 = vadd.f32 %v1621, %v1829
        %1831 = vmatmul.f32.gmra.mxu0 %v519
        %v1832 = vpop.f32.mrf.mxu0
        %v1833 = vadd.f32 %v1624, %v1832
        %1834 = vmatmul.f32.gmra.mxu0 %v527
        %v1835 = vpop.f32.mrf.mxu0
        %v1836 = vadd.f32 %v1627, %v1835
        %1837 = vmatmul.f32.gmra.mxu0 %v535
        %v1838 = vpop.f32.mrf.mxu0
        %v1839 = vadd.f32 %v1630, %v1838
        %1840 = vmatmul.f32.gmra.mxu0 %v543
        %v1841 = vpop.f32.mrf.mxu0
        %v1842 = vadd.f32 %v1633, %v1841
        %1843 = vmatmul.f32.gmra.mxu0 %v551
        %v1844 = vpop.f32.mrf.mxu0
        %v1845 = vadd.f32 %v1636, %v1844
        %1846 = vmatmul.f32.gmra.mxu0 %v559
        %v1847 = vpop.f32.mrf.mxu0
        %v1848 = vadd.f32 %v1639, %v1847
        %1849 = vmatmul.f32.gmra.mxu0 %v567
        %v1850 = vpop.f32.mrf.mxu0
        %v1851 = vadd.f32 %v1642, %v1850
        %1852 = vmatmul.f32.gmra.mxu0 %v575
        %v1853 = vpop.f32.mrf.mxu0
        %v1854 = vadd.f32 %v1645, %v1853
        %1855 = vmatmul.f32.gmra.mxu0 %v583
        %v1856 = vpop.f32.mrf.mxu0
        %v1857 = vadd.f32 %v1648, %v1856
        %1858 = vmatmul.f32.gmra.mxu0 %v591
        %v1859 = vpop.f32.mrf.mxu0
        %v1860 = vadd.f32 %v1651, %v1859
        %1861 = vmatmul.f32.gmra.mxu0 %v599
        %v1862 = vpop.f32.mrf.mxu0
        %v1863 = vadd.f32 %v1654, %v1862
        %1864 = vmatmul.f32.gmra.mxu0 %v607
        %v1865 = vpop.f32.mrf.mxu0
        %v1866 = vadd.f32 %v1657, %v1865
        %1867 = vmatmul.f32.gmra.mxu0 %v615
        %v1868 = vpop.f32.mrf.mxu0
        %v1869 = vadd.f32 %v1660, %v1868
        %1870 = vmatmul.f32.gmra.mxu0 %v623
        %v1871 = vpop.f32.mrf.mxu0
        %v1872 = vadd.f32 %v1663, %v1871
        %1873 = vmatmul.f32.gmra.mxu0 %v631
        %v1874 = vpop.f32.mrf.mxu0
        %v1875 = vadd.f32 %v1666, %v1874
        %1876 = vmatmul.f32.gmra.mxu0 %v639
        %v1877 = vpop.f32.mrf.mxu0
        %v1878 = vadd.f32 %v1669, %v1877
        %1879 = vmatmul.f32.gmra.mxu0 %v647
        %v1880 = vpop.f32.mrf.mxu0
        %v1881 = vadd.f32 %v1672, %v1880
        %1882 = vmatmul.f32.gmra.mxu0 %v655
        %v1883 = vpop.f32.mrf.mxu0
        %v1884 = vadd.f32 %v1675, %v1883
        %1885 = vmatmul.f32.gmra.mxu0 %v663
        %v1886 = vpop.f32.mrf.mxu0
        %v1887 = vadd.f32 %v1678, %v1886
        %1888 = vmatmul.f32.gmra.mxu0 %v671
        %v1889 = vpop.f32.mrf.mxu0
        %v1890 = vadd.f32 %v1681, %v1889
        %1891 = vmatmul.f32.gmra.mxu0 %v679
        %v1892 = vpop.f32.mrf.mxu0
        %v1893 = vadd.f32 %v1684, %v1892
        %1894 = vmatmul.f32.gmra.mxu0 %v687
        %v1895 = vpop.f32.mrf.mxu0
        %v1896 = vadd.f32 %v1687, %v1895
        %1897 = vmatmul.f32.gmra.mxu0 %v695
        %v1898 = vpop.f32.mrf.mxu0
        %v1899 = vadd.f32 %v1690, %v1898
        %1900 = vmatmul.f32.gmra.mxu0 %v703
        %v1901 = vpop.f32.mrf.mxu0
        %v1902 = vadd.f32 %v1693, %v1901
        %1903 = vmatmul.f32.gmra.mxu0 %v711
        %v1904 = vpop.f32.mrf.mxu0
        %v1905 = vadd.f32 %v1696, %v1904
        %1906 = vmatmul.f32.gmra.mxu0 %v719
        %v1907 = vpop.f32.mrf.mxu0
        %v1908 = vadd.f32 %v1699, %v1907
        %1909 = vmatmul.f32.gmra.mxu0 %v727
        %v1910 = vpop.f32.mrf.mxu0
        %v1911 = vadd.f32 %v1702, %v1910
        %1912 = vmatmul.f32.gmra.mxu0 %v735
        %v1913 = vpop.f32.mrf.mxu0
        %v1914 = vadd.f32 %v1705, %v1913
        %1915 = vdwg.mxu0
        %1916 = vmatpush.msra.mxu0 %v834
        %1917 = vmatpush.msra.mxu0 %v833
        %1918 = vmatpush.msra.mxu0 %v832
        %1919 = vmatpush.msra.mxu0 %v831
        %1920 = vmatpush.msra.mxu0 %v830
        %1921 = vmatpush.msra.mxu0 %v829
        %1922 = vmatpush.msra.mxu0 %v828
        %1923 = vmatpush.msra.mxu0 %v827
        %1924 = vmatpush.msra.mxu0 %v826
        %1925 = vmatpush.msra.mxu0 %v825
        %1926 = vmatpush.msra.mxu0 %v824
        %1927 = vmatpush.msra.mxu0 %v823
        %1928 = vmatpush.msra.mxu0 %v822
        %1929 = vmatpush.msra.mxu0 %v821
        %1930 = vmatpush.msra.mxu0 %v820
        %1931 = vmatpush.msra.mxu0 %v819
        %1932 = vmatmul.f32.gmra.mxu0 %v232
        %v1933 = vpop.f32.mrf.mxu0
        %v1934 = vadd.f32 %v1725, %v1933
        %1935 = vmatmul.f32.gmra.mxu0 %v240
        %v1936 = vpop.f32.mrf.mxu0
        %v1937 = vadd.f32 %v1728, %v1936
        %1938 = vmatmul.f32.gmra.mxu0 %v248
        %v1939 = vpop.f32.mrf.mxu0
        %v1940 = vadd.f32 %v1731, %v1939
        %1941 = vmatmul.f32.gmra.mxu0 %v256
        %v1942 = vpop.f32.mrf.mxu0
        %v1943 = vadd.f32 %v1734, %v1942
        %1944 = vmatmul.f32.gmra.mxu0 %v264
        %v1945 = vpop.f32.mrf.mxu0
        %v1946 = vadd.f32 %v1737, %v1945
        %1947 = vmatmul.f32.gmra.mxu0 %v272
        %v1948 = vpop.f32.mrf.mxu0
        %v1949 = vadd.f32 %v1740, %v1948
        %1950 = vmatmul.f32.gmra.mxu0 %v280
        %v1951 = vpop.f32.mrf.mxu0
        %v1952 = vadd.f32 %v1743, %v1951
        %1953 = vmatmul.f32.gmra.mxu0 %v288
        %v1954 = vpop.f32.mrf.mxu0
        %v1955 = vadd.f32 %v1746, %v1954
        %1956 = vmatmul.f32.gmra.mxu0 %v296
        %v1957 = vpop.f32.mrf.mxu0
        %v1958 = vadd.f32 %v1749, %v1957
        %1959 = vmatmul.f32.gmra.mxu0 %v304
        %v1960 = vpop.f32.mrf.mxu0
        %v1961 = vadd.f32 %v1752, %v1960
        %1962 = vmatmul.f32.gmra.mxu0 %v312
        %v1963 = vpop.f32.mrf.mxu0
        %v1964 = vadd.f32 %v1755, %v1963
        %1965 = vmatmul.f32.gmra.mxu0 %v320
        %v1966 = vpop.f32.mrf.mxu0
        %v1967 = vadd.f32 %v1758, %v1966
        %1968 = vmatmul.f32.gmra.mxu0 %v328
        %v1969 = vpop.f32.mrf.mxu0
        %v1970 = vadd.f32 %v1761, %v1969
        %1971 = vmatmul.f32.gmra.mxu0 %v336
        %v1972 = vpop.f32.mrf.mxu0
        %v1973 = vadd.f32 %v1764, %v1972
        %1974 = vmatmul.f32.gmra.mxu0 %v344
        %v1975 = vpop.f32.mrf.mxu0
        %v1976 = vadd.f32 %v1767, %v1975
        %1977 = vmatmul.f32.gmra.mxu0 %v352
        %v1978 = vpop.f32.mrf.mxu0
        %v1979 = vadd.f32 %v1770, %v1978
        %1980 = vmatmul.f32.gmra.mxu0 %v360
        %v1981 = vpop.f32.mrf.mxu0
        %v1982 = vadd.f32 %v1773, %v1981
        %1983 = vmatmul.f32.gmra.mxu0 %v368
        %v1984 = vpop.f32.mrf.mxu0
        %v1985 = vadd.f32 %v1776, %v1984
        %1986 = vmatmul.f32.gmra.mxu0 %v376
        %v1987 = vpop.f32.mrf.mxu0
        %v1988 = vadd.f32 %v1779, %v1987
        %1989 = vmatmul.f32.gmra.mxu0 %v384
        %v1990 = vpop.f32.mrf.mxu0
        %v1991 = vadd.f32 %v1782, %v1990
        %1992 = vmatmul.f32.gmra.mxu0 %v392
        %v1993 = vpop.f32.mrf.mxu0
        %v1994 = vadd.f32 %v1785, %v1993
        %1995 = vmatmul.f32.gmra.mxu0 %v400
        %v1996 = vpop.f32.mrf.mxu0
        %v1997 = vadd.f32 %v1788, %v1996
        %1998 = vmatmul.f32.gmra.mxu0 %v408
        %v1999 = vpop.f32.mrf.mxu0
        %v2000 = vadd.f32 %v1791, %v1999
        %2001 = vmatmul.f32.gmra.mxu0 %v416
        %v2002 = vpop.f32.mrf.mxu0
        %v2003 = vadd.f32 %v1794, %v2002
        %2004 = vmatmul.f32.gmra.mxu0 %v424
        %v2005 = vpop.f32.mrf.mxu0
        %v2006 = vadd.f32 %v1797, %v2005
        %2007 = vmatmul.f32.gmra.mxu0 %v432
        %v2008 = vpop.f32.mrf.mxu0
        %v2009 = vadd.f32 %v1800, %v2008
        %2010 = vmatmul.f32.gmra.mxu0 %v440
        %v2011 = vpop.f32.mrf.mxu0
        %v2012 = vadd.f32 %v1803, %v2011
        %2013 = vmatmul.f32.gmra.mxu0 %v448
        %v2014 = vpop.f32.mrf.mxu0
        %v2015 = vadd.f32 %v1806, %v2014
        %2016 = vmatmul.f32.gmra.mxu0 %v456
        %v2017 = vpop.f32.mrf.mxu0
        %v2018 = vadd.f32 %v1809, %v2017
        %2019 = vmatmul.f32.gmra.mxu0 %v464
        %v2020 = vpop.f32.mrf.mxu0
        %v2021 = vadd.f32 %v1812, %v2020
        %2022 = vmatmul.f32.gmra.mxu0 %v472
        %v2023 = vpop.f32.mrf.mxu0
        %v2024 = vadd.f32 %v1815, %v2023
        %2025 = vmatmul.f32.gmra.mxu0 %v480
        %v2026 = vpop.f32.mrf.mxu0
        %v2027 = vadd.f32 %v1818, %v2026
        %2028 = vmatmul.f32.gmra.mxu0 %v488
        %v2029 = vpop.f32.mrf.mxu0
        %v2030 = vadd.f32 %v1821, %v2029
        %2031 = vmatmul.f32.gmra.mxu0 %v496
        %v2032 = vpop.f32.mrf.mxu0
        %v2033 = vadd.f32 %v1824, %v2032
        %2034 = vmatmul.f32.gmra.mxu0 %v504
        %v2035 = vpop.f32.mrf.mxu0
        %v2036 = vadd.f32 %v1827, %v2035
        %2037 = vmatmul.f32.gmra.mxu0 %v512
        %v2038 = vpop.f32.mrf.mxu0
        %v2039 = vadd.f32 %v1830, %v2038
        %2040 = vmatmul.f32.gmra.mxu0 %v520
        %v2041 = vpop.f32.mrf.mxu0
        %v2042 = vadd.f32 %v1833, %v2041
        %2043 = vmatmul.f32.gmra.mxu0 %v528
        %v2044 = vpop.f32.mrf.mxu0
        %v2045 = vadd.f32 %v1836, %v2044
        %2046 = vmatmul.f32.gmra.mxu0 %v536
        %v2047 = vpop.f32.mrf.mxu0
        %v2048 = vadd.f32 %v1839, %v2047
        %2049 = vmatmul.f32.gmra.mxu0 %v544
        %v2050 = vpop.f32.mrf.mxu0
        %v2051 = vadd.f32 %v1842, %v2050
        %2052 = vmatmul.f32.gmra.mxu0 %v552
        %v2053 = vpop.f32.mrf.mxu0
        %v2054 = vadd.f32 %v1845, %v2053
        %2055 = vmatmul.f32.gmra.mxu0 %v560
        %v2056 = vpop.f32.mrf.mxu0
        %v2057 = vadd.f32 %v1848, %v2056
        %2058 = vmatmul.f32.gmra.mxu0 %v568
        %v2059 = vpop.f32.mrf.mxu0
        %v2060 = vadd.f32 %v1851, %v2059
        %2061 = vmatmul.f32.gmra.mxu0 %v576
        %v2062 = vpop.f32.mrf.mxu0
        %v2063 = vadd.f32 %v1854, %v2062
        %2064 = vmatmul.f32.gmra.mxu0 %v584
        %v2065 = vpop.f32.mrf.mxu0
        %v2066 = vadd.f32 %v1857, %v2065
        %2067 = vmatmul.f32.gmra.mxu0 %v592
        %v2068 = vpop.f32.mrf.mxu0
        %v2069 = vadd.f32 %v1860, %v2068
        %2070 = vmatmul.f32.gmra.mxu0 %v600
        %v2071 = vpop.f32.mrf.mxu0
        %v2072 = vadd.f32 %v1863, %v2071
        %2073 = vmatmul.f32.gmra.mxu0 %v608
        %v2074 = vpop.f32.mrf.mxu0
        %v2075 = vadd.f32 %v1866, %v2074
        %2076 = vmatmul.f32.gmra.mxu0 %v616
        %v2077 = vpop.f32.mrf.mxu0
        %v2078 = vadd.f32 %v1869, %v2077
        %2079 = vmatmul.f32.gmra.mxu0 %v624
        %v2080 = vpop.f32.mrf.mxu0
        %v2081 = vadd.f32 %v1872, %v2080
        %2082 = vmatmul.f32.gmra.mxu0 %v632
        %v2083 = vpop.f32.mrf.mxu0
        %v2084 = vadd.f32 %v1875, %v2083
        %2085 = vmatmul.f32.gmra.mxu0 %v640
        %v2086 = vpop.f32.mrf.mxu0
        %v2087 = vadd.f32 %v1878, %v2086
        %2088 = vmatmul.f32.gmra.mxu0 %v648
        %v2089 = vpop.f32.mrf.mxu0
        %v2090 = vadd.f32 %v1881, %v2089
        %2091 = vmatmul.f32.gmra.mxu0 %v656
        %v2092 = vpop.f32.mrf.mxu0
        %v2093 = vadd.f32 %v1884, %v2092
        %2094 = vmatmul.f32.gmra.mxu0 %v664
        %v2095 = vpop.f32.mrf.mxu0
        %v2096 = vadd.f32 %v1887, %v2095
        %2097 = vmatmul.f32.gmra.mxu0 %v672
        %v2098 = vpop.f32.mrf.mxu0
        %v2099 = vadd.f32 %v1890, %v2098
        %2100 = vmatmul.f32.gmra.mxu0 %v680
        %v2101 = vpop.f32.mrf.mxu0
        %v2102 = vadd.f32 %v1893, %v2101
        %2103 = vmatmul.f32.gmra.mxu0 %v688
        %v2104 = vpop.f32.mrf.mxu0
        %v2105 = vadd.f32 %v1896, %v2104
        %2106 = vmatmul.f32.gmra.mxu0 %v696
        %v2107 = vpop.f32.mrf.mxu0
        %v2108 = vadd.f32 %v1899, %v2107
        %2109 = vmatmul.f32.gmra.mxu0 %v704
        %v2110 = vpop.f32.mrf.mxu0
        %v2111 = vadd.f32 %v1902, %v2110
        %2112 = vmatmul.f32.gmra.mxu0 %v712
        %v2113 = vpop.f32.mrf.mxu0
        %v2114 = vadd.f32 %v1905, %v2113
        %2115 = vmatmul.f32.gmra.mxu0 %v720
        %v2116 = vpop.f32.mrf.mxu0
        %v2117 = vadd.f32 %v1908, %v2116
        %2118 = vmatmul.f32.gmra.mxu0 %v728
        %v2119 = vpop.f32.mrf.mxu0
        %v2120 = vadd.f32 %v1911, %v2119
        %2121 = vmatmul.f32.gmra.mxu0 %v736
        %v2122 = vpop.f32.mrf.mxu0
        %v2123 = vadd.f32 %v1914, %v2122
        %2124 = vdwg.mxu0
        %2125 = vmatpush.msra.mxu0 %v850
        %2126 = vmatpush.msra.mxu0 %v849
        %2127 = vmatpush.msra.mxu0 %v848
        %2128 = vmatpush.msra.mxu0 %v847
        %2129 = vmatpush.msra.mxu0 %v846
        %2130 = vmatpush.msra.mxu0 %v845
        %2131 = vmatpush.msra.mxu0 %v844
        %2132 = vmatpush.msra.mxu0 %v843
        %2133 = vmatpush.msra.mxu0 %v842
        %2134 = vmatpush.msra.mxu0 %v841
        %2135 = vmatpush.msra.mxu0 %v840
        %2136 = vmatpush.msra.mxu0 %v839
        %2137 = vmatpush.msra.mxu0 %v838
        %2138 = vmatpush.msra.mxu0 %v837
        %2139 = vmatpush.msra.mxu0 %v836
        %2140 = vmatpush.msra.mxu0 %v835
        %2141 = vmatmul.f32.gmra.mxu0 %v233
        %v2142 = vpop.f32.mrf.mxu0
        %v2143 = vadd.f32 %v1934, %v2142
        %2144 = vmatmul.f32.gmra.mxu0 %v241
        %v2145 = vpop.f32.mrf.mxu0
        %v2146 = vadd.f32 %v1937, %v2145
        %2147 = vmatmul.f32.gmra.mxu0 %v249
        %v2148 = vpop.f32.mrf.mxu0
        %v2149 = vadd.f32 %v1940, %v2148
        %2150 = vmatmul.f32.gmra.mxu0 %v257
        %v2151 = vpop.f32.mrf.mxu0
        %v2152 = vadd.f32 %v1943, %v2151
        %2153 = vmatmul.f32.gmra.mxu0 %v265
        %v2154 = vpop.f32.mrf.mxu0
        %v2155 = vadd.f32 %v1946, %v2154
        %2156 = vmatmul.f32.gmra.mxu0 %v273
        %v2157 = vpop.f32.mrf.mxu0
        %v2158 = vadd.f32 %v1949, %v2157
        %2159 = vmatmul.f32.gmra.mxu0 %v281
        %v2160 = vpop.f32.mrf.mxu0
        %v2161 = vadd.f32 %v1952, %v2160
        %2162 = vmatmul.f32.gmra.mxu0 %v289
        %v2163 = vpop.f32.mrf.mxu0
        %v2164 = vadd.f32 %v1955, %v2163
        %2165 = vmatmul.f32.gmra.mxu0 %v297
        %v2166 = vpop.f32.mrf.mxu0
        %v2167 = vadd.f32 %v1958, %v2166
        %2168 = vmatmul.f32.gmra.mxu0 %v305
        %v2169 = vpop.f32.mrf.mxu0
        %v2170 = vadd.f32 %v1961, %v2169
        %2171 = vmatmul.f32.gmra.mxu0 %v313
        %v2172 = vpop.f32.mrf.mxu0
        %v2173 = vadd.f32 %v1964, %v2172
        %2174 = vmatmul.f32.gmra.mxu0 %v321
        %v2175 = vpop.f32.mrf.mxu0
        %v2176 = vadd.f32 %v1967, %v2175
        %2177 = vmatmul.f32.gmra.mxu0 %v329
        %v2178 = vpop.f32.mrf.mxu0
        %v2179 = vadd.f32 %v1970, %v2178
        %2180 = vmatmul.f32.gmra.mxu0 %v337
        %v2181 = vpop.f32.mrf.mxu0
        %v2182 = vadd.f32 %v1973, %v2181
        %2183 = vmatmul.f32.gmra.mxu0 %v345
        %v2184 = vpop.f32.mrf.mxu0
        %v2185 = vadd.f32 %v1976, %v2184
        %2186 = vmatmul.f32.gmra.mxu0 %v353
        %v2187 = vpop.f32.mrf.mxu0
        %v2188 = vadd.f32 %v1979, %v2187
        %2189 = vmatmul.f32.gmra.mxu0 %v361
        %v2190 = vpop.f32.mrf.mxu0
        %v2191 = vadd.f32 %v1982, %v2190
        %2192 = vmatmul.f32.gmra.mxu0 %v369
        %v2193 = vpop.f32.mrf.mxu0
        %v2194 = vadd.f32 %v1985, %v2193
        %2195 = vmatmul.f32.gmra.mxu0 %v377
        %v2196 = vpop.f32.mrf.mxu0
        %v2197 = vadd.f32 %v1988, %v2196
        %2198 = vmatmul.f32.gmra.mxu0 %v385
        %v2199 = vpop.f32.mrf.mxu0
        %v2200 = vadd.f32 %v1991, %v2199
        %2201 = vmatmul.f32.gmra.mxu0 %v393
        %v2202 = vpop.f32.mrf.mxu0
        %v2203 = vadd.f32 %v1994, %v2202
        %2204 = vmatmul.f32.gmra.mxu0 %v401
        %v2205 = vpop.f32.mrf.mxu0
        %v2206 = vadd.f32 %v1997, %v2205
        %2207 = vmatmul.f32.gmra.mxu0 %v409
        %v2208 = vpop.f32.mrf.mxu0
        %v2209 = vadd.f32 %v2000, %v2208
        %2210 = vmatmul.f32.gmra.mxu0 %v417
        %v2211 = vpop.f32.mrf.mxu0
        %v2212 = vadd.f32 %v2003, %v2211
        %2213 = vmatmul.f32.gmra.mxu0 %v425
        %v2214 = vpop.f32.mrf.mxu0
        %v2215 = vadd.f32 %v2006, %v2214
        %2216 = vmatmul.f32.gmra.mxu0 %v433
        %v2217 = vpop.f32.mrf.mxu0
        %v2218 = vadd.f32 %v2009, %v2217
        %2219 = vmatmul.f32.gmra.mxu0 %v441
        %v2220 = vpop.f32.mrf.mxu0
        %v2221 = vadd.f32 %v2012, %v2220
        %2222 = vmatmul.f32.gmra.mxu0 %v449
        %v2223 = vpop.f32.mrf.mxu0
        %v2224 = vadd.f32 %v2015, %v2223
        %2225 = vmatmul.f32.gmra.mxu0 %v457
        %v2226 = vpop.f32.mrf.mxu0
        %v2227 = vadd.f32 %v2018, %v2226
        %2228 = vmatmul.f32.gmra.mxu0 %v465
        %v2229 = vpop.f32.mrf.mxu0
        %v2230 = vadd.f32 %v2021, %v2229
        %2231 = vmatmul.f32.gmra.mxu0 %v473
        %v2232 = vpop.f32.mrf.mxu0
        %v2233 = vadd.f32 %v2024, %v2232
        %2234 = vmatmul.f32.gmra.mxu0 %v481
        %v2235 = vpop.f32.mrf.mxu0
        %v2236 = vadd.f32 %v2027, %v2235
        %2237 = vmatmul.f32.gmra.mxu0 %v489
        %v2238 = vpop.f32.mrf.mxu0
        %v2239 = vadd.f32 %v2030, %v2238
        %2240 = vmatmul.f32.gmra.mxu0 %v497
        %v2241 = vpop.f32.mrf.mxu0
        %v2242 = vadd.f32 %v2033, %v2241
        %2243 = vmatmul.f32.gmra.mxu0 %v505
        %v2244 = vpop.f32.mrf.mxu0
        %v2245 = vadd.f32 %v2036, %v2244
        %2246 = vmatmul.f32.gmra.mxu0 %v513
        %v2247 = vpop.f32.mrf.mxu0
        %v2248 = vadd.f32 %v2039, %v2247
        %2249 = vmatmul.f32.gmra.mxu0 %v521
        %v2250 = vpop.f32.mrf.mxu0
        %v2251 = vadd.f32 %v2042, %v2250
        %2252 = vmatmul.f32.gmra.mxu0 %v529
        %v2253 = vpop.f32.mrf.mxu0
        %v2254 = vadd.f32 %v2045, %v2253
        %2255 = vmatmul.f32.gmra.mxu0 %v537
        %v2256 = vpop.f32.mrf.mxu0
        %v2257 = vadd.f32 %v2048, %v2256
        %2258 = vmatmul.f32.gmra.mxu0 %v545
        %v2259 = vpop.f32.mrf.mxu0
        %v2260 = vadd.f32 %v2051, %v2259
        %2261 = vmatmul.f32.gmra.mxu0 %v553
        %v2262 = vpop.f32.mrf.mxu0
        %v2263 = vadd.f32 %v2054, %v2262
        %2264 = vmatmul.f32.gmra.mxu0 %v561
        %v2265 = vpop.f32.mrf.mxu0
        %v2266 = vadd.f32 %v2057, %v2265
        %2267 = vmatmul.f32.gmra.mxu0 %v569
        %v2268 = vpop.f32.mrf.mxu0
        %v2269 = vadd.f32 %v2060, %v2268
        %2270 = vmatmul.f32.gmra.mxu0 %v577
        %v2271 = vpop.f32.mrf.mxu0
        %v2272 = vadd.f32 %v2063, %v2271
        %2273 = vmatmul.f32.gmra.mxu0 %v585
        %v2274 = vpop.f32.mrf.mxu0
        %v2275 = vadd.f32 %v2066, %v2274
        %2276 = vmatmul.f32.gmra.mxu0 %v593
        %v2277 = vpop.f32.mrf.mxu0
        %v2278 = vadd.f32 %v2069, %v2277
        %2279 = vmatmul.f32.gmra.mxu0 %v601
        %v2280 = vpop.f32.mrf.mxu0
        %v2281 = vadd.f32 %v2072, %v2280
        %2282 = vmatmul.f32.gmra.mxu0 %v609
        %v2283 = vpop.f32.mrf.mxu0
        %v2284 = vadd.f32 %v2075, %v2283
        %2285 = vmatmul.f32.gmra.mxu0 %v617
        %v2286 = vpop.f32.mrf.mxu0
        %v2287 = vadd.f32 %v2078, %v2286
        %2288 = vmatmul.f32.gmra.mxu0 %v625
        %v2289 = vpop.f32.mrf.mxu0
        %v2290 = vadd.f32 %v2081, %v2289
        %2291 = vmatmul.f32.gmra.mxu0 %v633
        %v2292 = vpop.f32.mrf.mxu0
        %v2293 = vadd.f32 %v2084, %v2292
        %2294 = vmatmul.f32.gmra.mxu0 %v641
        %v2295 = vpop.f32.mrf.mxu0
        %v2296 = vadd.f32 %v2087, %v2295
        %2297 = vmatmul.f32.gmra.mxu0 %v649
        %v2298 = vpop.f32.mrf.mxu0
        %v2299 = vadd.f32 %v2090, %v2298
        %2300 = vmatmul.f32.gmra.mxu0 %v657
        %v2301 = vpop.f32.mrf.mxu0
        %v2302 = vadd.f32 %v2093, %v2301
        %2303 = vmatmul.f32.gmra.mxu0 %v665
        %v2304 = vpop.f32.mrf.mxu0
        %v2305 = vadd.f32 %v2096, %v2304
        %2306 = vmatmul.f32.gmra.mxu0 %v673
        %v2307 = vpop.f32.mrf.mxu0
        %v2308 = vadd.f32 %v2099, %v2307
        %2309 = vmatmul.f32.gmra.mxu0 %v681
        %v2310 = vpop.f32.mrf.mxu0
        %v2311 = vadd.f32 %v2102, %v2310
        %2312 = vmatmul.f32.gmra.mxu0 %v689
        %v2313 = vpop.f32.mrf.mxu0
        %v2314 = vadd.f32 %v2105, %v2313
        %2315 = vmatmul.f32.gmra.mxu0 %v697
        %v2316 = vpop.f32.mrf.mxu0
        %v2317 = vadd.f32 %v2108, %v2316
        %2318 = vmatmul.f32.gmra.mxu0 %v705
        %v2319 = vpop.f32.mrf.mxu0
        %v2320 = vadd.f32 %v2111, %v2319
        %2321 = vmatmul.f32.gmra.mxu0 %v713
        %v2322 = vpop.f32.mrf.mxu0
        %v2323 = vadd.f32 %v2114, %v2322
        %2324 = vmatmul.f32.gmra.mxu0 %v721
        %v2325 = vpop.f32.mrf.mxu0
        %v2326 = vadd.f32 %v2117, %v2325
        %2327 = vmatmul.f32.gmra.mxu0 %v729
        %v2328 = vpop.f32.mrf.mxu0
        %v2329 = vadd.f32 %v2120, %v2328
        %2330 = vmatmul.f32.gmra.mxu0 %v737
        %v2331 = vpop.f32.mrf.mxu0
        %v2332 = vadd.f32 %v2123, %v2331
        %2333 = vdwg.mxu0
        %2334 = vmatpush.msra.mxu0 %v866
        %2335 = vmatpush.msra.mxu0 %v865
        %2336 = vmatpush.msra.mxu0 %v864
        %2337 = vmatpush.msra.mxu0 %v863
        %2338 = vmatpush.msra.mxu0 %v862
        %2339 = vmatpush.msra.mxu0 %v861
        %2340 = vmatpush.msra.mxu0 %v860
        %2341 = vmatpush.msra.mxu0 %v859
        %2342 = vmatpush.msra.mxu0 %v858
        %2343 = vmatpush.msra.mxu0 %v857
        %2344 = vmatpush.msra.mxu0 %v856
        %2345 = vmatpush.msra.mxu0 %v855
        %2346 = vmatpush.msra.mxu0 %v854
        %2347 = vmatpush.msra.mxu0 %v853
        %2348 = vmatpush.msra.mxu0 %v852
        %2349 = vmatpush.msra.mxu0 %v851
        %2350 = vmatmul.f32.gmra.mxu0 %v234
        %v2351 = vpop.f32.mrf.mxu0
        %v2352 = vadd.f32 %v2143, %v2351
        %2353 = vmatmul.f32.gmra.mxu0 %v242
        %v2354 = vpop.f32.mrf.mxu0
        %v2355 = vadd.f32 %v2146, %v2354
        %2356 = vmatmul.f32.gmra.mxu0 %v250
        %v2357 = vpop.f32.mrf.mxu0
        %v2358 = vadd.f32 %v2149, %v2357
        %2359 = vmatmul.f32.gmra.mxu0 %v258
        %v2360 = vpop.f32.mrf.mxu0
        %v2361 = vadd.f32 %v2152, %v2360
        %2362 = vmatmul.f32.gmra.mxu0 %v266
        %v2363 = vpop.f32.mrf.mxu0
        %v2364 = vadd.f32 %v2155, %v2363
        %2365 = vmatmul.f32.gmra.mxu0 %v274
        %v2366 = vpop.f32.mrf.mxu0
        %v2367 = vadd.f32 %v2158, %v2366
        %2368 = vmatmul.f32.gmra.mxu0 %v282
        %v2369 = vpop.f32.mrf.mxu0
        %v2370 = vadd.f32 %v2161, %v2369
        %2371 = vmatmul.f32.gmra.mxu0 %v290
        %v2372 = vpop.f32.mrf.mxu0
        %v2373 = vadd.f32 %v2164, %v2372
        %2374 = vmatmul.f32.gmra.mxu0 %v298
        %v2375 = vpop.f32.mrf.mxu0
        %v2376 = vadd.f32 %v2167, %v2375
        %2377 = vmatmul.f32.gmra.mxu0 %v306
        %v2378 = vpop.f32.mrf.mxu0
        %v2379 = vadd.f32 %v2170, %v2378
        %2380 = vmatmul.f32.gmra.mxu0 %v314
        %v2381 = vpop.f32.mrf.mxu0
        %v2382 = vadd.f32 %v2173, %v2381
        %2383 = vmatmul.f32.gmra.mxu0 %v322
        %v2384 = vpop.f32.mrf.mxu0
        %v2385 = vadd.f32 %v2176, %v2384
        %2386 = vmatmul.f32.gmra.mxu0 %v330
        %v2387 = vpop.f32.mrf.mxu0
        %v2388 = vadd.f32 %v2179, %v2387
        %2389 = vmatmul.f32.gmra.mxu0 %v338
        %v2390 = vpop.f32.mrf.mxu0
        %v2391 = vadd.f32 %v2182, %v2390
        %2392 = vmatmul.f32.gmra.mxu0 %v346
        %v2393 = vpop.f32.mrf.mxu0
        %v2394 = vadd.f32 %v2185, %v2393
        %2395 = vmatmul.f32.gmra.mxu0 %v354
        %v2396 = vpop.f32.mrf.mxu0
        %v2397 = vadd.f32 %v2188, %v2396
        %2398 = vmatmul.f32.gmra.mxu0 %v362
        %v2399 = vpop.f32.mrf.mxu0
        %v2400 = vadd.f32 %v2191, %v2399
        %2401 = vmatmul.f32.gmra.mxu0 %v370
        %v2402 = vpop.f32.mrf.mxu0
        %v2403 = vadd.f32 %v2194, %v2402
        %2404 = vmatmul.f32.gmra.mxu0 %v378
        %v2405 = vpop.f32.mrf.mxu0
        %v2406 = vadd.f32 %v2197, %v2405
        %2407 = vmatmul.f32.gmra.mxu0 %v386
        %v2408 = vpop.f32.mrf.mxu0
        %v2409 = vadd.f32 %v2200, %v2408
        %2410 = vmatmul.f32.gmra.mxu0 %v394
        %v2411 = vpop.f32.mrf.mxu0
        %v2412 = vadd.f32 %v2203, %v2411
        %2413 = vmatmul.f32.gmra.mxu0 %v402
        %v2414 = vpop.f32.mrf.mxu0
        %v2415 = vadd.f32 %v2206, %v2414
        %2416 = vmatmul.f32.gmra.mxu0 %v410
        %v2417 = vpop.f32.mrf.mxu0
        %v2418 = vadd.f32 %v2209, %v2417
        %2419 = vmatmul.f32.gmra.mxu0 %v418
        %v2420 = vpop.f32.mrf.mxu0
        %v2421 = vadd.f32 %v2212, %v2420
        %2422 = vmatmul.f32.gmra.mxu0 %v426
        %v2423 = vpop.f32.mrf.mxu0
        %v2424 = vadd.f32 %v2215, %v2423
        %2425 = vmatmul.f32.gmra.mxu0 %v434
        %v2426 = vpop.f32.mrf.mxu0
        %v2427 = vadd.f32 %v2218, %v2426
        %2428 = vmatmul.f32.gmra.mxu0 %v442
        %v2429 = vpop.f32.mrf.mxu0
        %v2430 = vadd.f32 %v2221, %v2429
        %2431 = vmatmul.f32.gmra.mxu0 %v450
        %v2432 = vpop.f32.mrf.mxu0
        %v2433 = vadd.f32 %v2224, %v2432
        %2434 = vmatmul.f32.gmra.mxu0 %v458
        %v2435 = vpop.f32.mrf.mxu0
        %v2436 = vadd.f32 %v2227, %v2435
        %2437 = vmatmul.f32.gmra.mxu0 %v466
        %v2438 = vpop.f32.mrf.mxu0
        %v2439 = vadd.f32 %v2230, %v2438
        %2440 = vmatmul.f32.gmra.mxu0 %v474
        %v2441 = vpop.f32.mrf.mxu0
        %v2442 = vadd.f32 %v2233, %v2441
        %2443 = vmatmul.f32.gmra.mxu0 %v482
        %v2444 = vpop.f32.mrf.mxu0
        %v2445 = vadd.f32 %v2236, %v2444
        %2446 = vmatmul.f32.gmra.mxu0 %v490
        %v2447 = vpop.f32.mrf.mxu0
        %v2448 = vadd.f32 %v2239, %v2447
        %2449 = vmatmul.f32.gmra.mxu0 %v498
        %v2450 = vpop.f32.mrf.mxu0
        %v2451 = vadd.f32 %v2242, %v2450
        %2452 = vmatmul.f32.gmra.mxu0 %v506
        %v2453 = vpop.f32.mrf.mxu0
        %v2454 = vadd.f32 %v2245, %v2453
        %2455 = vmatmul.f32.gmra.mxu0 %v514
        %v2456 = vpop.f32.mrf.mxu0
        %v2457 = vadd.f32 %v2248, %v2456
        %2458 = vmatmul.f32.gmra.mxu0 %v522
        %v2459 = vpop.f32.mrf.mxu0
        %v2460 = vadd.f32 %v2251, %v2459
        %2461 = vmatmul.f32.gmra.mxu0 %v530
        %v2462 = vpop.f32.mrf.mxu0
        %v2463 = vadd.f32 %v2254, %v2462
        %2464 = vmatmul.f32.gmra.mxu0 %v538
        %v2465 = vpop.f32.mrf.mxu0
        %v2466 = vadd.f32 %v2257, %v2465
        %2467 = vmatmul.f32.gmra.mxu0 %v546
        %v2468 = vpop.f32.mrf.mxu0
        %v2469 = vadd.f32 %v2260, %v2468
        %2470 = vmatmul.f32.gmra.mxu0 %v554
        %v2471 = vpop.f32.mrf.mxu0
        %v2472 = vadd.f32 %v2263, %v2471
        %2473 = vmatmul.f32.gmra.mxu0 %v562
        %v2474 = vpop.f32.mrf.mxu0
        %v2475 = vadd.f32 %v2266, %v2474
        %2476 = vmatmul.f32.gmra.mxu0 %v570
        %v2477 = vpop.f32.mrf.mxu0
        %v2478 = vadd.f32 %v2269, %v2477
        %2479 = vmatmul.f32.gmra.mxu0 %v578
        %v2480 = vpop.f32.mrf.mxu0
        %v2481 = vadd.f32 %v2272, %v2480
        %2482 = vmatmul.f32.gmra.mxu0 %v586
        %v2483 = vpop.f32.mrf.mxu0
        %v2484 = vadd.f32 %v2275, %v2483
        %2485 = vmatmul.f32.gmra.mxu0 %v594
        %v2486 = vpop.f32.mrf.mxu0
        %v2487 = vadd.f32 %v2278, %v2486
        %2488 = vmatmul.f32.gmra.mxu0 %v602
        %v2489 = vpop.f32.mrf.mxu0
        %v2490 = vadd.f32 %v2281, %v2489
        %2491 = vmatmul.f32.gmra.mxu0 %v610
        %v2492 = vpop.f32.mrf.mxu0
        %v2493 = vadd.f32 %v2284, %v2492
        %2494 = vmatmul.f32.gmra.mxu0 %v618
        %v2495 = vpop.f32.mrf.mxu0
        %v2496 = vadd.f32 %v2287, %v2495
        %2497 = vmatmul.f32.gmra.mxu0 %v626
        %v2498 = vpop.f32.mrf.mxu0
        %v2499 = vadd.f32 %v2290, %v2498
        %2500 = vmatmul.f32.gmra.mxu0 %v634
        %v2501 = vpop.f32.mrf.mxu0
        %v2502 = vadd.f32 %v2293, %v2501
        %2503 = vmatmul.f32.gmra.mxu0 %v642
        %v2504 = vpop.f32.mrf.mxu0
        %v2505 = vadd.f32 %v2296, %v2504
        %2506 = vmatmul.f32.gmra.mxu0 %v650
        %v2507 = vpop.f32.mrf.mxu0
        %v2508 = vadd.f32 %v2299, %v2507
        %2509 = vmatmul.f32.gmra.mxu0 %v658
        %v2510 = vpop.f32.mrf.mxu0
        %v2511 = vadd.f32 %v2302, %v2510
        %2512 = vmatmul.f32.gmra.mxu0 %v666
        %v2513 = vpop.f32.mrf.mxu0
        %v2514 = vadd.f32 %v2305, %v2513
        %2515 = vmatmul.f32.gmra.mxu0 %v674
        %v2516 = vpop.f32.mrf.mxu0
        %v2517 = vadd.f32 %v2308, %v2516
        %2518 = vmatmul.f32.gmra.mxu0 %v682
        %v2519 = vpop.f32.mrf.mxu0
        %v2520 = vadd.f32 %v2311, %v2519
        %2521 = vmatmul.f32.gmra.mxu0 %v690
        %v2522 = vpop.f32.mrf.mxu0
        %v2523 = vadd.f32 %v2314, %v2522
        %2524 = vmatmul.f32.gmra.mxu0 %v698
        %v2525 = vpop.f32.mrf.mxu0
        %v2526 = vadd.f32 %v2317, %v2525
        %2527 = vmatmul.f32.gmra.mxu0 %v706
        %v2528 = vpop.f32.mrf.mxu0
        %v2529 = vadd.f32 %v2320, %v2528
        %2530 = vmatmul.f32.gmra.mxu0 %v714
        %v2531 = vpop.f32.mrf.mxu0
        %v2532 = vadd.f32 %v2323, %v2531
        %2533 = vmatmul.f32.gmra.mxu0 %v722
        %v2534 = vpop.f32.mrf.mxu0
        %v2535 = vadd.f32 %v2326, %v2534
        %2536 = vmatmul.f32.gmra.mxu0 %v730
        %v2537 = vpop.f32.mrf.mxu0
        %v2538 = vadd.f32 %v2329, %v2537
        %2539 = vmatmul.f32.gmra.mxu0 %v738
        %v2540 = vpop.f32.mrf.mxu0
        %v2541 = vadd.f32 %v2332, %v2540
        %2542 = vdwg.mxu0
        %2543 = vst [vmem:[%s225] sm:$0xff] %v2352
        %2544 = vst [vmem:[%s225 + $0x8] sm:$0xff] %v2355
        %2545 = vst [vmem:[%s225 + $0x10] sm:$0xff] %v2358
        %2546 = vst [vmem:[%s225 + $0x18] sm:$0xff] %v2361
        %2547 = vst [vmem:[%s225 + $0x20] sm:$0xff] %v2364
        %2548 = vst [vmem:[%s225 + $0x28] sm:$0xff] %v2367
        %2549 = vst [vmem:[%s225 + $0x30] sm:$0xff] %v2370
        %2550 = vst [vmem:[%s225 + $0x38] sm:$0xff] %v2373
        %2551 = vst [vmem:[%s225 + $0x40] sm:$0xff] %v2376
        %2552 = vst [vmem:[%s225 + $0x48] sm:$0xff] %v2379
        %2553 = vst [vmem:[%s225 + $0x50] sm:$0xff] %v2382
        %2554 = vst [vmem:[%s225 + $0x58] sm:$0xff] %v2385
        %2555 = vst [vmem:[%s225 + $0x60] sm:$0xff] %v2388
        %2556 = vst [vmem:[%s225 + $0x68] sm:$0xff] %v2391
        %2557 = vst [vmem:[%s225 + $0x70] sm:$0xff] %v2394
        %2558 = vst [vmem:[%s225 + $0x78] sm:$0xff] %v2397
        %2559 = vst [vmem:[%s225 + $0x80] sm:$0xff] %v2400
        %2560 = vst [vmem:[%s225 + $0x88] sm:$0xff] %v2403
        %2561 = vst [vmem:[%s225 + $0x90] sm:$0xff] %v2406
        %2562 = vst [vmem:[%s225 + $0x98] sm:$0xff] %v2409
        %2563 = vst [vmem:[%s225 + $0xa0] sm:$0xff] %v2412
        %2564 = vst [vmem:[%s225 + $0xa8] sm:$0xff] %v2415
        %2565 = vst [vmem:[%s225 + $0xb0] sm:$0xff] %v2418
        %2566 = vst [vmem:[%s225 + $0xb8] sm:$0xff] %v2421
        %2567 = vst [vmem:[%s225 + $0xc0] sm:$0xff] %v2424
        %2568 = vst [vmem:[%s225 + $0xc8] sm:$0xff] %v2427
        %2569 = vst [vmem:[%s225 + $0xd0] sm:$0xff] %v2430
        %2570 = vst [vmem:[%s225 + $0xd8] sm:$0xff] %v2433
        %2571 = vst [vmem:[%s225 + $0xe0] sm:$0xff] %v2436
        %2572 = vst [vmem:[%s225 + $0xe8] sm:$0xff] %v2439
        %2573 = vst [vmem:[%s225 + $0xf0] sm:$0xff] %v2442
        %2574 = vst [vmem:[%s225 + $0xf8] sm:$0xff] %v2445
        %2575 = vst [vmem:[%s225 + $0x100] sm:$0xff] %v2448
        %2576 = vst [vmem:[%s225 + $0x108] sm:$0xff] %v2451
        %2577 = vst [vmem:[%s225 + $0x110] sm:$0xff] %v2454
        %2578 = vst [vmem:[%s225 + $0x118] sm:$0xff] %v2457
        %2579 = vst [vmem:[%s225 + $0x120] sm:$0xff] %v2460
        %2580 = vst [vmem:[%s225 + $0x128] sm:$0xff] %v2463
        %2581 = vst [vmem:[%s225 + $0x130] sm:$0xff] %v2466
        %2582 = vst [vmem:[%s225 + $0x138] sm:$0xff] %v2469
        %2583 = vst [vmem:[%s225 + $0x140] sm:$0xff] %v2472
        %2584 = vst [vmem:[%s225 + $0x148] sm:$0xff] %v2475
        %2585 = vst [vmem:[%s225 + $0x150] sm:$0xff] %v2478
        %2586 = vst [vmem:[%s225 + $0x158] sm:$0xff] %v2481
        %2587 = vst [vmem:[%s225 + $0x160] sm:$0xff] %v2484
        %2588 = vst [vmem:[%s225 + $0x168] sm:$0xff] %v2487
        %2589 = vst [vmem:[%s225 + $0x170] sm:$0xff] %v2490
        %2590 = vst [vmem:[%s225 + $0x178] sm:$0xff] %v2493
        %2591 = vst [vmem:[%s225 + $0x180] sm:$0xff] %v2496
        %2592 = vst [vmem:[%s225 + $0x188] sm:$0xff] %v2499
        %2593 = vst [vmem:[%s225 + $0x190] sm:$0xff] %v2502
        %2594 = vst [vmem:[%s225 + $0x198] sm:$0xff] %v2505
        %2595 = vst [vmem:[%s225 + $0x1a0] sm:$0xff] %v2508
        %2596 = vst [vmem:[%s225 + $0x1a8] sm:$0xff] %v2511
        %2597 = vst [vmem:[%s225 + $0x1b0] sm:$0xff] %v2514
        %2598 = vst [vmem:[%s225 + $0x1b8] sm:$0xff] %v2517
        %2599 = vst [vmem:[%s225 + $0x1c0] sm:$0xff] %v2520
        %2600 = vst [vmem:[%s225 + $0x1c8] sm:$0xff] %v2523
        %2601 = vst [vmem:[%s225 + $0x1d0] sm:$0xff] %v2526
        %2602 = vst [vmem:[%s225 + $0x1d8] sm:$0xff] %v2529
        %2603 = vst [vmem:[%s225 + $0x1e0] sm:$0xff] %v2532
        %2604 = vst [vmem:[%s225 + $0x1e8] sm:$0xff] %v2535
        %2605 = vst [vmem:[%s225 + $0x1f0] sm:$0xff] %v2538
        %2606 = vst [vmem:[%s225 + $0x1f8] sm:$0xff] %v2541
        %s2607 = smul.u32 64, %s18
        %p2608 = scmp.lt.s32.totalorder %s2607, 127
        %s2609 = scalar_select %p2608, %s2607, 127
        %s2610 = smul.addr %s2609, 8
        %s2611 = scalar_lea.vmem %s3, %s2610
        // Predicated region
        $region45: #{_linear_pallas_padded.1} parent=31 // pred_check
          %p2612 = pneg %p104
        $region46: #{_linear_pallas_padded.1} parent=31 // pred_check_branch
          %2614 = sbr.rel (%p2612) target = $region48
        $region47: #{_linear_pallas_padded.1} parent=31 // pred_region
          %s2615 = smul.u32 64, %s18
        $region48: #{_linear_pallas_padded.1} parent=31 // pred_fallthru
          _
      $region32: #{_linear_pallas_padded.1} parent=5 // pred_fallthru
        _
      %p2616 = scmp.le.s32.totalorder 2, %s13
      // Predicated region
      $region49: #{_linear_pallas_padded.1} parent=5 // pred_check
        %p2617 = pneg %p2616
      $region50: #{_linear_pallas_padded.1} parent=5 // pred_check_branch
        %2619 = sbr.rel (%p2617) target = $region52
      $region51: #{_linear_pallas_padded.1} parent=5 // pred_region
        %s2620 = ssub.s32 %s13, 2
        // Predicated region
        $region53: #{_linear_pallas_padded.1} parent=51 // pred_check
          %p2621 = pneg %p110
        $region54: #{_linear_pallas_padded.1} parent=51 // pred_check_branch
          %2623 = sbr.rel (%p2621) target = $region56
        $region55: #{_linear_pallas_padded.1} parent=51 // pred_region
          %s2624 = smul.u32 64, %s19
          %p2625 = scmp.lt.s32.totalorder %s2624, 127
          %s2626 = scalar_select %p2625, %s2624, 127
          %s2627 = smul.addr %s2626, 8
          %s2628 = scalar_lea.vmem %s3, %s2627
        $region56: #{_linear_pallas_padded.1} parent=51 // pred_fallthru
          _
      $region52: #{_linear_pallas_padded.1} parent=5 // pred_fallthru
        _
    $region6: #{_linear_pallas_padded.1} parent=1 // loop_footer
      %s17 = sadd.s32 1, %s13
    $region7: #{_linear_pallas_padded.1} parent=1 // loop_footer_branch
      %12 = sbr.rel target = $region3
    $region8: #{_linear_pallas_padded.1} parent=1 // loop_exit
      _
    %2629 = vsyncpa [#allocation3], 1
    %s2630 = scalar_lea.sflag [#allocation3], 1
    %2631 = vsyncpa %s2630, 1
    %2632 = vsyncpa [#allocation5], 1

</llo_original>
